<compile_context>
chip_gen: v6e
topology: v6e:2x2x1
jax: 0.10.0
libtpu: 0.0.40
codegen_flags: <defaults>
</compile_context>

<pallas_src>
import jax
import jax.numpy as jnp
from jax.experimental import pallas as pl
from jax.experimental.pallas import tpu as pltpu

T = 4        # number of ACFGConv iterations, as in the PyTorch module
LANE = 128   # TPU lane width; out_channels padded to a multiple of this


def siamese_fused_kernel(adj_ref, x_ref, u_ref, rmask_ref, nmask_ref,
                         w1w_ref, w1b_ref, sw_ref, sb_ref,
                         w2w_ref, w2b_ref, g_ref):
    """Single invocation, both Siamese branches fused (node rows stacked).

    adj   : (2, Np, Np)    bf16 dense adjacency per branch, adj[b, dst, src]
                           (NOTE: edge multiplicities exact in bf16 up to 256)
    x     : (2*Np, Cin)    bf16 static node attributes, rows of both graphs
    u     : (2*Np, CP)     bf16 initial node embeddings (zero-padded rows/cols)
    rmask : (2, 2*Np)      f32 readout selector (row b = 1 on branch b's nodes)
    nmask : (2*Np, 1)      f32 node-row mask (1 for real nodes)
    w1w   : (T, Cin, CP)   bf16 ; w1b: (T, 1, CP)  f32
    sw    : (T, 3, CP, CP) bf16 ; sb : (T, 3, 1, CP) f32
    w2w   : (CP, CP)       f32  ; w2b: (1, CP)     f32   (final Linear in f32)
    g     : (2, CP)        f32 output graph embeddings (one row per branch)
    """
    npad = adj_ref.shape[1]

    adj1 = adj_ref[0]
    adj2 = adj_ref[1]
    x = x_ref[...]
    nmask = nmask_ref[...]
    u = u_ref[...].astype(jnp.float32)          # (2N, CP)

    for t in range(T):                          # static unroll over conv layers
        ub = u.astype(jnp.bfloat16)
        # message + aggr='add': agg[i] = sum_{j : (j->i) in E} u[j], per branch
        agg1 = jnp.dot(adj1, ub[:npad], preferred_element_type=jnp.float32)
        agg2 = jnp.dot(adj2, ub[npad:], preferred_element_type=jnp.float32)
        agg = jnp.concatenate([agg1, agg2], axis=0)          # (2N, CP)

        # sigmod = Linear -> ReLU -> Linear -> ReLU -> Linear -> Tanh
        h = jnp.dot(agg.astype(jnp.bfloat16), sw_ref[t, 0],
                    preferred_element_type=jnp.float32) + sb_ref[t, 0]
        h = jnp.maximum(h, 0.0)
        h = jnp.dot(h.astype(jnp.bfloat16), sw_ref[t, 1],
                    preferred_element_type=jnp.float32) + sb_ref[t, 1]
        h = jnp.maximum(h, 0.0)
        h = jnp.dot(h.astype(jnp.bfloat16), sw_ref[t, 2],
                    preferred_element_type=jnp.float32) + sb_ref[t, 2]
        h = jnp.tanh(h)

        # update(): relu(w1(x) + sigmod(agg)).  w1(x) recomputed per layer so no
        # (2N, T*CP) f32 activation stays live across the loop; padded rows are
        # re-zeroed so bias-driven values never accumulate on fake nodes.
        xl = jnp.dot(x, w1w_ref[t], preferred_element_type=jnp.float32) + w1b_ref[t]
        u = jnp.maximum(xl + h, 0.0) * nmask

    # readout on the MXU: g[b] = sum over branch b's real node rows of u.
    g = jnp.dot(rmask_ref[...], u, preferred_element_type=jnp.float32)  # (2, CP)
    # final Linear (w2) in f32 — off the hot path, tighter parity.
    g_ref[...] = (jnp.dot(g, w2w_ref[...], preferred_element_type=jnp.float32)
                  + w2b_ref[...])


def _round_up(n, m):
    return ((n + m - 1) // m) * m


def prepare_params(params):
    """Zero-pad out_channels to a 128 multiple and cast once (exact padding).
    Call once; keep the result — this is hoisted off the per-call path."""
    cout = params["w2w"].shape[-1]
    cp = _round_up(cout, LANE)
    pad = cp - cout
    return dict(
        w1w=jnp.pad(params["w1w"], ((0, 0), (0, 0), (0, pad))).astype(jnp.bfloat16),
        w1b=jnp.pad(params["w1b"], ((0, 0), (0, 0), (0, pad))).astype(jnp.float32),
        sw=jnp.pad(params["sw"], ((0, 0), (0, 0), (0, pad), (0, pad))).astype(jnp.bfloat16),
        sb=jnp.pad(params["sb"], ((0, 0), (0, 0), (0, 0), (0, pad))).astype(jnp.float32),
        w2w=jnp.pad(params["w2w"], ((0, pad), (0, pad))).astype(jnp.float32),
        w2b=jnp.pad(params["w2b"], ((0, 0), (0, pad))).astype(jnp.float32),
    )


@jax.jit
def siamese_forward(x1, u1, edge_index1, x2, u2, edge_index2, packed):
    """Equivalent of SiameseNetwork.forward: returns (g1, g2), each (1, out_channels).
    `packed` is the output of prepare_params (pre-padded / pre-cast weights)."""
    cin = x1.shape[1]
    cout = u1.shape[1]
    cp = packed["w2w"].shape[-1]
    n1, n2 = x1.shape[0], x2.shape[0]
    npad = max(_round_up(max(n1, n2), 16), 16)   # bf16 vregs pack [16,128]

    def dense_adj(edge_index):
        a = jnp.zeros((npad, npad), jnp.float32)
        return a.at[edge_index[1], edge_index[0]].add(1.0)

    adj = jnp.stack([dense_adj(edge_index1),
                     dense_adj(edge_index2)]).astype(jnp.bfloat16)   # (2,Np,Np)
    x = jnp.concatenate([
        jnp.pad(x1, ((0, npad - n1), (0, 0))),
        jnp.pad(x2, ((0, npad - n2), (0, 0))),
    ], axis=0).astype(jnp.bfloat16)                                  # (2Np,Cin)
    u0 = jnp.concatenate([
        jnp.pad(u1, ((0, npad - n1), (0, cp - cout))),
        jnp.pad(u2, ((0, npad - n2), (0, cp - cout))),
    ], axis=0).astype(jnp.bfloat16)                                  # (2Np,CP)

    iota = jnp.arange(npad)
    m1 = (iota < n1).astype(jnp.float32)
    m2 = (iota < n2).astype(jnp.float32)
    z = jnp.zeros((npad,), jnp.float32)
    rmask = jnp.stack([jnp.concatenate([m1, z]),
                       jnp.concatenate([z, m2])])                    # (2, 2Np)
    nmask = jnp.concatenate([m1, m2])[:, None]                       # (2Np, 1)

    operands = (adj, x, u0, rmask, nmask,
                packed["w1w"], packed["w1b"], packed["sw"], packed["sb"],
                packed["w2w"], packed["w2b"])

    # Scoped-VMEM limit from a static footprint estimate (matters for large
    # graphs on v5e's 16 MiB default); clamped to stay valid on v7x (64 MiB).
    arg_bytes = sum(int(a.size) * a.dtype.itemsize for a in operands)
    vmem_limit = int(min(max(4 * arg_bytes + (8 << 20), 16 << 20), 60 << 20))

    # Single fused invocation: no grid, full arrays resident in VMEM; both
    # branches share one set of weight tiles and one set of M=2*Np matmuls.
    out = pl.pallas_call(
        siamese_fused_kernel,
        out_shape=jax.ShapeDtypeStruct((2, cp), jnp.float32),
        compiler_params=pltpu.CompilerParams(vmem_limit_bytes=vmem_limit),
    )(*operands)

    return out[0:1, :cout], out[1:2, :cout]


def init_params(key, in_channels, out_channels):
    """Deterministic synthetic parameters matching the PyTorch module's shapes.
    Linear weights are stored pre-transposed as (in_features, out_features)."""
    ks = jax.random.split(key, 6)
    scale = 0.1
    return {
        "w1w": scale * jax.random.normal(ks[0], (T, in_channels, out_channels), jnp.float32),
        "w1b": scale * jax.random.normal(ks[1], (T, 1, out_channels), jnp.float32),
        "sw": scale * jax.random.normal(ks[2], (T, 3, out_channels, out_channels), jnp.float32),
        "sb": scale * jax.random.normal(ks[3], (T, 3, 1, out_channels), jnp.float32),
        "w2w": scale * jax.random.normal(ks[4], (out_channels, out_channels), jnp.float32),
        "w2b": scale * jax.random.normal(ks[5], (1, out_channels), jnp.float32),
    }


def forward_once_ref(x, u, edge_index, params):
    """Pure-JAX f32 reference mirroring the PyTorch forward (for validation)."""
    n = x.shape[0]
    adj = jnp.zeros((n, n), jnp.float32).at[edge_index[1], edge_index[0]].add(1.0)
    for t in range(T):
        agg = adj @ u
        xl = x @ params["w1w"][t] + params["w1b"][t]
        h = jnp.maximum(agg @ params["sw"][t, 0] + params["sb"][t, 0], 0.0)
        h = jnp.maximum(h @ params["sw"][t, 1] + params["sb"][t, 1], 0.0)
        h = jnp.tanh(h @ params["sw"][t, 2] + params["sb"][t, 2])
        u = jnp.maximum(xl + h, 0.0)
    g = jnp.sum(u, axis=0, keepdims=True)
    return g @ params["w2w"] + params["w2b"]


if __name__ == "__main__":
    key = jax.random.PRNGKey(0)
    in_channels, out_channels, n_nodes = 16, 32, 8

    k_p, k_x1, k_u1, k_x2, k_u2 = jax.random.split(key, 5)
    params = init_params(k_p, in_channels, out_channels)
    packed = prepare_params(params)            # hoisted off the per-call path

    # Graph 1: ring over 8 nodes.
    x1 = jax.random.normal(k_x1, (n_nodes, in_channels), jnp.float32)
    u1 = jax.random.normal(k_u1, (n_nodes, out_channels), jnp.float32)
    src1 = jnp.arange(n_nodes, dtype=jnp.int32)
    dst1 = (src1 + 1) % n_nodes
    edge_index1 = jnp.stack([src1, dst1], axis=0)  # (2, E)

    # Graph 2: reversed ring plus two chords.
    x2 = jax.random.normal(k_x2, (n_nodes, in_channels), jnp.float32)
    u2 = jax.random.normal(k_u2, (n_nodes, out_channels), jnp.float32)
    src2 = jnp.concatenate([dst1, jnp.array([0, 3], jnp.int32)])
    dst2 = jnp.concatenate([src1, jnp.array([4, 7], jnp.int32)])
    edge_index2 = jnp.stack([src2, dst2], axis=0)

    g1, g2 = siamese_forward(x1, u1, edge_index1, x2, u2, edge_index2, packed)
    jax.block_until_ready((g1, g2))

    assert g1.shape == (1, out_channels) and g2.shape == (1, out_channels)
    assert bool(jnp.all(jnp.isfinite(g1))) and bool(jnp.all(jnp.isfinite(g2)))

    # Compare to the f32 pure-JAX reference (bf16 MXU hot path -> loose tolerance).
    r1 = forward_once_ref(x1, u1, edge_index1, params)
    r2 = forward_once_ref(x2, u2, edge_index2, params)
    err = float(jnp.max(jnp.abs(jnp.concatenate([g1 - r1, g2 - r2]))))
    assert err < 0.25, f"max abs diff vs reference too large: {err}"

    print("KERNEL_OK")
</pallas_src>

<mosaic_0001>
module attributes {stable_mosaic.version = 11 : i64} {
  func.func private @main(%arg0: i32) attributes {dimension_semantics = [#tpu.dimension_semantics<core_parallel>], iteration_bounds = array<i64: 2>, tpu.core_type = #tpu.core_type<sc_scalar_subcore>, window_params = []} {
    return
  }
}

module attributes {stable_mosaic.version = 11 : i64} {
  func.func private @main(%arg0: i32) attributes {dimension_semantics = [#tpu.dimension_semantics<core_parallel>], iteration_bounds = array<i64: 2>, tpu.core_type = #tpu.core_type<sc_scalar_subcore>, window_params = []} {
    return
  }
}

module attributes {stable_mosaic.version = 11 : i64} {
  func.func @siamese_fused_kernel(%arg0: memref<2x16x16xbf16, #tpu.memory_space<vmem>>, %arg1: memref<32x16xbf16, #tpu.memory_space<vmem>>, %arg2: memref<32x128xbf16, #tpu.memory_space<vmem>>, %arg3: memref<2x32xf32, #tpu.memory_space<vmem>>, %arg4: memref<32x1xf32, #tpu.memory_space<vmem>>, %arg5: memref<4x16x128xbf16, #tpu.memory_space<vmem>>, %arg6: memref<4x1x128xf32, #tpu.memory_space<vmem>>, %arg7: memref<4x3x128x128xbf16, #tpu.memory_space<vmem>>, %arg8: memref<4x3x1x128xf32, #tpu.memory_space<vmem>>, %arg9: memref<128x128xf32, #tpu.memory_space<vmem>>, %arg10: memref<1x128xf32, #tpu.memory_space<vmem>>, %arg11: memref<2x128xf32, #tpu.memory_space<vmem>>) attributes {dimension_semantics = [], scalar_prefetch = 0 : i64, scratch_operands = 0 : i64, tpu.core_type = #tpu.core_type<tc>} {
    %c0 = arith.constant 0 : index
    %c0_0 = arith.constant 0 : index
    %c0_1 = arith.constant 0 : index
    %0 = vector.load %arg0[%c0, %c0_0, %c0_1] : memref<2x16x16xbf16, #tpu.memory_space<vmem>>, vector<1x16x16xbf16>
    %1 = vector.shape_cast %0 : vector<1x16x16xbf16> to vector<16x16xbf16>
    %c1 = arith.constant 1 : index
    %c0_2 = arith.constant 0 : index
    %c0_3 = arith.constant 0 : index
    %2 = vector.load %arg0[%c1, %c0_2, %c0_3] : memref<2x16x16xbf16, #tpu.memory_space<vmem>>, vector<1x16x16xbf16>
    %3 = vector.shape_cast %2 : vector<1x16x16xbf16> to vector<16x16xbf16>
    %c0_4 = arith.constant 0 : index
    %c0_5 = arith.constant 0 : index
    %4 = vector.load %arg1[%c0_4, %c0_5] : memref<32x16xbf16, #tpu.memory_space<vmem>>, vector<32x16xbf16>
    %c0_6 = arith.constant 0 : index
    %c0_7 = arith.constant 0 : index
    %5 = vector.load %arg4[%c0_6, %c0_7] : memref<32x1xf32, #tpu.memory_space<vmem>>, vector<32x1xf32>
    %c0_8 = arith.constant 0 : index
    %c0_9 = arith.constant 0 : index
    %6 = vector.load %arg2[%c0_8, %c0_9] : memref<32x128xbf16, #tpu.memory_space<vmem>>, vector<32x128xbf16>
    %7 = arith.extf %6 : vector<32x128xbf16> to vector<32x128xf32>
    %8 = arith.truncf %7 : vector<32x128xf32> to vector<32x128xbf16>
    %9 = vector.extract_strided_slice %8 {offsets = [0, 0], sizes = [16, 128], strides = [1, 1]} : vector<32x128xbf16> to vector<16x128xbf16>
    %cst = arith.constant dense<0.000000e+00> : vector<16x128xf32>
    %10 = tpu.matmul %1, %9, %cst {dimension_numbers = #tpu.dot_dimension_numbers<[1], [0], [0], [1], [0, 0, 1, 1], [], []>} : vector<16x16xbf16>, vector<16x128xbf16>, vector<16x128xf32> -> vector<16x128xf32>
    %11 = vector.extract_strided_slice %8 {offsets = [16, 0], sizes = [16, 128], strides = [1, 1]} : vector<32x128xbf16> to vector<16x128xbf16>
    %cst_10 = arith.constant dense<0.000000e+00> : vector<16x128xf32>
    %12 = tpu.matmul %3, %11, %cst_10 {dimension_numbers = #tpu.dot_dimension_numbers<[1], [0], [0], [1], [0, 0, 1, 1], [], []>} : vector<16x16xbf16>, vector<16x128xbf16>, vector<16x128xf32> -> vector<16x128xf32>
    %13 = tpu.concatenate %10, %12 in 0 : vector<16x128xf32>, vector<16x128xf32> -> vector<32x128xf32>
    %14 = arith.truncf %13 : vector<32x128xf32> to vector<32x128xbf16>
    %c0_11 = arith.constant 0 : index
    %c0_12 = arith.constant 0 : index
    %c0_13 = arith.constant 0 : index
    %c0_14 = arith.constant 0 : index
    %15 = vector.load %arg7[%c0_11, %c0_12, %c0_13, %c0_14] : memref<4x3x128x128xbf16, #tpu.memory_space<vmem>>, vector<1x1x128x128xbf16>
    %16 = vector.shape_cast %15 : vector<1x1x128x128xbf16> to vector<128x128xbf16>
    %cst_15 = arith.constant dense<0.000000e+00> : vector<32x128xf32>
    %17 = tpu.matmul %14, %16, %cst_15 {dimension_numbers = #tpu.dot_dimension_numbers<[1], [0], [0], [1], [0, 0, 1, 1], [], []>} : vector<32x128xbf16>, vector<128x128xbf16>, vector<32x128xf32> -> vector<32x128xf32>
    %c0_16 = arith.constant 0 : index
    %c0_17 = arith.constant 0 : index
    %c0_18 = arith.constant 0 : index
    %c0_19 = arith.constant 0 : index
    %18 = vector.load %arg8[%c0_16, %c0_17, %c0_18, %c0_19] : memref<4x3x1x128xf32, #tpu.memory_space<vmem>>, vector<1x1x1x128xf32>
    %19 = vector.shape_cast %18 : vector<1x1x1x128xf32> to vector<1x128xf32>
    %20 = vector.broadcast %19 : vector<1x128xf32> to vector<32x128xf32>
    %21 = arith.addf %17, %20 : vector<32x128xf32>
    %cst_20 = arith.constant 0.000000e+00 : f32
    %22 = vector.broadcast %cst_20 : f32 to vector<32x128xf32>
    %23 = arith.maximumf %21, %22 : vector<32x128xf32>
    %24 = arith.truncf %23 : vector<32x128xf32> to vector<32x128xbf16>
    %c0_21 = arith.constant 0 : index
    %c1_22 = arith.constant 1 : index
    %c0_23 = arith.constant 0 : index
    %c0_24 = arith.constant 0 : index
    %25 = vector.load %arg7[%c0_21, %c1_22, %c0_23, %c0_24] : memref<4x3x128x128xbf16, #tpu.memory_space<vmem>>, vector<1x1x128x128xbf16>
    %26 = vector.shape_cast %25 : vector<1x1x128x128xbf16> to vector<128x128xbf16>
    %cst_25 = arith.constant dense<0.000000e+00> : vector<32x128xf32>
    %27 = tpu.matmul %24, %26, %cst_25 {dimension_numbers = #tpu.dot_dimension_numbers<[1], [0], [0], [1], [0, 0, 1, 1], [], []>} : vector<32x128xbf16>, vector<128x128xbf16>, vector<32x128xf32> -> vector<32x128xf32>
    %c0_26 = arith.constant 0 : index
    %c1_27 = arith.constant 1 : index
    %c0_28 = arith.constant 0 : index
    %c0_29 = arith.constant 0 : index
    %28 = vector.load %arg8[%c0_26, %c1_27, %c0_28, %c0_29] : memref<4x3x1x128xf32, #tpu.memory_space<vmem>>, vector<1x1x1x128xf32>
    %29 = vector.shape_cast %28 : vector<1x1x1x128xf32> to vector<1x128xf32>
    %30 = vector.broadcast %29 : vector<1x128xf32> to vector<32x128xf32>
    %31 = arith.addf %27, %30 : vector<32x128xf32>
    %cst_30 = arith.constant 0.000000e+00 : f32
    %32 = vector.broadcast %cst_30 : f32 to vector<32x128xf32>
    %33 = arith.maximumf %31, %32 : vector<32x128xf32>
    %34 = arith.truncf %33 : vector<32x128xf32> to vector<32x128xbf16>
    %c0_31 = arith.constant 0 : index
    %c2 = arith.constant 2 : index
    %c0_32 = arith.constant 0 : index
    %c0_33 = arith.constant 0 : index
    %35 = vector.load %arg7[%c0_31, %c2, %c0_32, %c0_33] : memref<4x3x128x128xbf16, #tpu.memory_space<vmem>>, vector<1x1x128x128xbf16>
    %36 = vector.shape_cast %35 : vector<1x1x128x128xbf16> to vector<128x128xbf16>
    %cst_34 = arith.constant dense<0.000000e+00> : vector<32x128xf32>
    %37 = tpu.matmul %34, %36, %cst_34 {dimension_numbers = #tpu.dot_dimension_numbers<[1], [0], [0], [1], [0, 0, 1, 1], [], []>} : vector<32x128xbf16>, vector<128x128xbf16>, vector<32x128xf32> -> vector<32x128xf32>
    %c0_35 = arith.constant 0 : index
    %c2_36 = arith.constant 2 : index
    %c0_37 = arith.constant 0 : index
    %c0_38 = arith.constant 0 : index
    %38 = vector.load %arg8[%c0_35, %c2_36, %c0_37, %c0_38] : memref<4x3x1x128xf32, #tpu.memory_space<vmem>>, vector<1x1x1x128xf32>
    %39 = vector.shape_cast %38 : vector<1x1x1x128xf32> to vector<1x128xf32>
    %40 = vector.broadcast %39 : vector<1x128xf32> to vector<32x128xf32>
    %41 = arith.addf %37, %40 : vector<32x128xf32>
    %42 = math.tanh %41 : vector<32x128xf32>
    %c0_39 = arith.constant 0 : index
    %c0_40 = arith.constant 0 : index
    %c0_41 = arith.constant 0 : index
    %43 = vector.load %arg5[%c0_39, %c0_40, %c0_41] : memref<4x16x128xbf16, #tpu.memory_space<vmem>>, vector<1x16x128xbf16>
    %44 = vector.shape_cast %43 : vector<1x16x128xbf16> to vector<16x128xbf16>
    %cst_42 = arith.constant dense<0.000000e+00> : vector<32x128xf32>
    %45 = tpu.matmul %4, %44, %cst_42 {dimension_numbers = #tpu.dot_dimension_numbers<[1], [0], [0], [1], [0, 0, 1, 1], [], []>} : vector<32x16xbf16>, vector<16x128xbf16>, vector<32x128xf32> -> vector<32x128xf32>
    %c0_43 = arith.constant 0 : index
    %c0_44 = arith.constant 0 : index
    %c0_45 = arith.constant 0 : index
    %46 = vector.load %arg6[%c0_43, %c0_44, %c0_45] : memref<4x1x128xf32, #tpu.memory_space<vmem>>, vector<1x1x128xf32>
    %47 = vector.shape_cast %46 : vector<1x1x128xf32> to vector<1x128xf32>
    %48 = vector.broadcast %47 : vector<1x128xf32> to vector<32x128xf32>
    %49 = arith.addf %45, %48 : vector<32x128xf32>
    %50 = arith.addf %49, %42 : vector<32x128xf32>
    %cst_46 = arith.constant 0.000000e+00 : f32
    %51 = vector.broadcast %cst_46 : f32 to vector<32x128xf32>
    %52 = arith.maximumf %50, %51 : vector<32x128xf32>
    %53 = vector.broadcast %5 : vector<32x1xf32> to vector<32x128xf32>
    %54 = arith.mulf %52, %53 : vector<32x128xf32>
    %55 = arith.truncf %54 : vector<32x128xf32> to vector<32x128xbf16>
    %56 = vector.extract_strided_slice %55 {offsets = [0, 0], sizes = [16, 128], strides = [1, 1]} : vector<32x128xbf16> to vector<16x128xbf16>
    %cst_47 = arith.constant dense<0.000000e+00> : vector<16x128xf32>
    %57 = tpu.matmul %1, %56, %cst_47 {dimension_numbers = #tpu.dot_dimension_numbers<[1], [0], [0], [1], [0, 0, 1, 1], [], []>} : vector<16x16xbf16>, vector<16x128xbf16>, vector<16x128xf32> -> vector<16x128xf32>
    %58 = vector.extract_strided_slice %55 {offsets = [16, 0], sizes = [16, 128], strides = [1, 1]} : vector<32x128xbf16> to vector<16x128xbf16>
    %cst_48 = arith.constant dense<0.000000e+00> : vector<16x128xf32>
    %59 = tpu.matmul %3, %58, %cst_48 {dimension_numbers = #tpu.dot_dimension_numbers<[1], [0], [0], [1], [0, 0, 1, 1], [], []>} : vector<16x16xbf16>, vector<16x128xbf16>, vector<16x128xf32> -> vector<16x128xf32>
    %60 = tpu.concatenate %57, %59 in 0 : vector<16x128xf32>, vector<16x128xf32> -> vector<32x128xf32>
    %61 = arith.truncf %60 : vector<32x128xf32> to vector<32x128xbf16>
    %c1_49 = arith.constant 1 : index
    %c0_50 = arith.constant 0 : index
    %c0_51 = arith.constant 0 : index
    %c0_52 = arith.constant 0 : index
    %62 = vector.load %arg7[%c1_49, %c0_50, %c0_51, %c0_52] : memref<4x3x128x128xbf16, #tpu.memory_space<vmem>>, vector<1x1x128x128xbf16>
    %63 = vector.shape_cast %62 : vector<1x1x128x128xbf16> to vector<128x128xbf16>
    %cst_53 = arith.constant dense<0.000000e+00> : vector<32x128xf32>
    %64 = tpu.matmul %61, %63, %cst_53 {dimension_numbers = #tpu.dot_dimension_numbers<[1], [0], [0], [1], [0, 0, 1, 1], [], []>} : vector<32x128xbf16>, vector<128x128xbf16>, vector<32x128xf32> -> vector<32x128xf32>
    %c1_54 = arith.constant 1 : index
    %c0_55 = arith.constant 0 : index
    %c0_56 = arith.constant 0 : index
    %c0_57 = arith.constant 0 : index
    %65 = vector.load %arg8[%c1_54, %c0_55, %c0_56, %c0_57] : memref<4x3x1x128xf32, #tpu.memory_space<vmem>>, vector<1x1x1x128xf32>
    %66 = vector.shape_cast %65 : vector<1x1x1x128xf32> to vector<1x128xf32>
    %67 = vector.broadcast %66 : vector<1x128xf32> to vector<32x128xf32>
    %68 = arith.addf %64, %67 : vector<32x128xf32>
    %cst_58 = arith.constant 0.000000e+00 : f32
    %69 = vector.broadcast %cst_58 : f32 to vector<32x128xf32>
    %70 = arith.maximumf %68, %69 : vector<32x128xf32>
    %71 = arith.truncf %70 : vector<32x128xf32> to vector<32x128xbf16>
    %c1_59 = arith.constant 1 : index
    %c1_60 = arith.constant 1 : index
    %c0_61 = arith.constant 0 : index
    %c0_62 = arith.constant 0 : index
    %72 = vector.load %arg7[%c1_59, %c1_60, %c0_61, %c0_62] : memref<4x3x128x128xbf16, #tpu.memory_space<vmem>>, vector<1x1x128x128xbf16>
    %73 = vector.shape_cast %72 : vector<1x1x128x128xbf16> to vector<128x128xbf16>
    %cst_63 = arith.constant dense<0.000000e+00> : vector<32x128xf32>
    %74 = tpu.matmul %71, %73, %cst_63 {dimension_numbers = #tpu.dot_dimension_numbers<[1], [0], [0], [1], [0, 0, 1, 1], [], []>} : vector<32x128xbf16>, vector<128x128xbf16>, vector<32x128xf32> -> vector<32x128xf32>
    %c1_64 = arith.constant 1 : index
    %c1_65 = arith.constant 1 : index
    %c0_66 = arith.constant 0 : index
    %c0_67 = arith.constant 0 : index
    %75 = vector.load %arg8[%c1_64, %c1_65, %c0_66, %c0_67] : memref<4x3x1x128xf32, #tpu.memory_space<vmem>>, vector<1x1x1x128xf32>
    %76 = vector.shape_cast %75 : vector<1x1x1x128xf32> to vector<1x128xf32>
    %77 = vector.broadcast %76 : vector<1x128xf32> to vector<32x128xf32>
    %78 = arith.addf %74, %77 : vector<32x128xf32>
    %cst_68 = arith.constant 0.000000e+00 : f32
    %79 = vector.broadcast %cst_68 : f32 to vector<32x128xf32>
    %80 = arith.maximumf %78, %79 : vector<32x128xf32>
    %81 = arith.truncf %80 : vector<32x128xf32> to vector<32x128xbf16>
    %c1_69 = arith.constant 1 : index
    %c2_70 = arith.constant 2 : index
    %c0_71 = arith.constant 0 : index
    %c0_72 = arith.constant 0 : index
    %82 = vector.load %arg7[%c1_69, %c2_70, %c0_71, %c0_72] : memref<4x3x128x128xbf16, #tpu.memory_space<vmem>>, vector<1x1x128x128xbf16>
    %83 = vector.shape_cast %82 : vector<1x1x128x128xbf16> to vector<128x128xbf16>
    %cst_73 = arith.constant dense<0.000000e+00> : vector<32x128xf32>
    %84 = tpu.matmul %81, %83, %cst_73 {dimension_numbers = #tpu.dot_dimension_numbers<[1], [0], [0], [1], [0, 0, 1, 1], [], []>} : vector<32x128xbf16>, vector<128x128xbf16>, vector<32x128xf32> -> vector<32x128xf32>
    %c1_74 = arith.constant 1 : index
    %c2_75 = arith.constant 2 : index
    %c0_76 = arith.constant 0 : index
    %c0_77 = arith.constant 0 : index
    %85 = vector.load %arg8[%c1_74, %c2_75, %c0_76, %c0_77] : memref<4x3x1x128xf32, #tpu.memory_space<vmem>>, vector<1x1x1x128xf32>
    %86 = vector.shape_cast %85 : vector<1x1x1x128xf32> to vector<1x128xf32>
    %87 = vector.broadcast %86 : vector<1x128xf32> to vector<32x128xf32>
    %88 = arith.addf %84, %87 : vector<32x128xf32>
    %89 = math.tanh %88 : vector<32x128xf32>
    %c1_78 = arith.constant 1 : index
    %c0_79 = arith.constant 0 : index
    %c0_80 = arith.constant 0 : index
    %90 = vector.load %arg5[%c1_78, %c0_79, %c0_80] : memref<4x16x128xbf16, #tpu.memory_space<vmem>>, vector<1x16x128xbf16>
    %91 = vector.shape_cast %90 : vector<1x16x128xbf16> to vector<16x128xbf16>
    %cst_81 = arith.constant dense<0.000000e+00> : vector<32x128xf32>
    %92 = tpu.matmul %4, %91, %cst_81 {dimension_numbers = #tpu.dot_dimension_numbers<[1], [0], [0], [1], [0, 0, 1, 1], [], []>} : vector<32x16xbf16>, vector<16x128xbf16>, vector<32x128xf32> -> vector<32x128xf32>
    %c1_82 = arith.constant 1 : index
    %c0_83 = arith.constant 0 : index
    %c0_84 = arith.constant 0 : index
    %93 = vector.load %arg6[%c1_82, %c0_83, %c0_84] : memref<4x1x128xf32, #tpu.memory_space<vmem>>, vector<1x1x128xf32>
    %94 = vector.shape_cast %93 : vector<1x1x128xf32> to vector<1x128xf32>
    %95 = vector.broadcast %94 : vector<1x128xf32> to vector<32x128xf32>
    %96 = arith.addf %92, %95 : vector<32x128xf32>
    %97 = arith.addf %96, %89 : vector<32x128xf32>
    %cst_85 = arith.constant 0.000000e+00 : f32
    %98 = vector.broadcast %cst_85 : f32 to vector<32x128xf32>
    %99 = arith.maximumf %97, %98 : vector<32x128xf32>
    %100 = vector.broadcast %5 : vector<32x1xf32> to vector<32x128xf32>
    %101 = arith.mulf %99, %100 : vector<32x128xf32>
    %102 = arith.truncf %101 : vector<32x128xf32> to vector<32x128xbf16>
    %103 = vector.extract_strided_slice %102 {offsets = [0, 0], sizes = [16, 128], strides = [1, 1]} : vector<32x128xbf16> to vector<16x128xbf16>
    %cst_86 = arith.constant dense<0.000000e+00> : vector<16x128xf32>
    %104 = tpu.matmul %1, %103, %cst_86 {dimension_numbers = #tpu.dot_dimension_numbers<[1], [0], [0], [1], [0, 0, 1, 1], [], []>} : vector<16x16xbf16>, vector<16x128xbf16>, vector<16x128xf32> -> vector<16x128xf32>
    %105 = vector.extract_strided_slice %102 {offsets = [16, 0], sizes = [16, 128], strides = [1, 1]} : vector<32x128xbf16> to vector<16x128xbf16>
    %cst_87 = arith.constant dense<0.000000e+00> : vector<16x128xf32>
    %106 = tpu.matmul %3, %105, %cst_87 {dimension_numbers = #tpu.dot_dimension_numbers<[1], [0], [0], [1], [0, 0, 1, 1], [], []>} : vector<16x16xbf16>, vector<16x128xbf16>, vector<16x128xf32> -> vector<16x128xf32>
    %107 = tpu.concatenate %104, %106 in 0 : vector<16x128xf32>, vector<16x128xf32> -> vector<32x128xf32>
    %108 = arith.truncf %107 : vector<32x128xf32> to vector<32x128xbf16>
    %c2_88 = arith.constant 2 : index
    %c0_89 = arith.constant 0 : index
    %c0_90 = arith.constant 0 : index
    %c0_91 = arith.constant 0 : index
    %109 = vector.load %arg7[%c2_88, %c0_89, %c0_90, %c0_91] : memref<4x3x128x128xbf16, #tpu.memory_space<vmem>>, vector<1x1x128x128xbf16>
    %110 = vector.shape_cast %109 : vector<1x1x128x128xbf16> to vector<128x128xbf16>
    %cst_92 = arith.constant dense<0.000000e+00> : vector<32x128xf32>
    %111 = tpu.matmul %108, %110, %cst_92 {dimension_numbers = #tpu.dot_dimension_numbers<[1], [0], [0], [1], [0, 0, 1, 1], [], []>} : vector<32x128xbf16>, vector<128x128xbf16>, vector<32x128xf32> -> vector<32x128xf32>
    %c2_93 = arith.constant 2 : index
    %c0_94 = arith.constant 0 : index
    %c0_95 = arith.constant 0 : index
    %c0_96 = arith.constant 0 : index
    %112 = vector.load %arg8[%c2_93, %c0_94, %c0_95, %c0_96] : memref<4x3x1x128xf32, #tpu.memory_space<vmem>>, vector<1x1x1x128xf32>
    %113 = vector.shape_cast %112 : vector<1x1x1x128xf32> to vector<1x128xf32>
    %114 = vector.broadcast %113 : vector<1x128xf32> to vector<32x128xf32>
    %115 = arith.addf %111, %114 : vector<32x128xf32>
    %cst_97 = arith.constant 0.000000e+00 : f32
    %116 = vector.broadcast %cst_97 : f32 to vector<32x128xf32>
    %117 = arith.maximumf %115, %116 : vector<32x128xf32>
    %118 = arith.truncf %117 : vector<32x128xf32> to vector<32x128xbf16>
    %c2_98 = arith.constant 2 : index
    %c1_99 = arith.constant 1 : index
    %c0_100 = arith.constant 0 : index
    %c0_101 = arith.constant 0 : index
    %119 = vector.load %arg7[%c2_98, %c1_99, %c0_100, %c0_101] : memref<4x3x128x128xbf16, #tpu.memory_space<vmem>>, vector<1x1x128x128xbf16>
    %120 = vector.shape_cast %119 : vector<1x1x128x128xbf16> to vector<128x128xbf16>
    %cst_102 = arith.constant dense<0.000000e+00> : vector<32x128xf32>
    %121 = tpu.matmul %118, %120, %cst_102 {dimension_numbers = #tpu.dot_dimension_numbers<[1], [0], [0], [1], [0, 0, 1, 1], [], []>} : vector<32x128xbf16>, vector<128x128xbf16>, vector<32x128xf32> -> vector<32x128xf32>
    %c2_103 = arith.constant 2 : index
    %c1_104 = arith.constant 1 : index
    %c0_105 = arith.constant 0 : index
    %c0_106 = arith.constant 0 : index
    %122 = vector.load %arg8[%c2_103, %c1_104, %c0_105, %c0_106] : memref<4x3x1x128xf32, #tpu.memory_space<vmem>>, vector<1x1x1x128xf32>
    %123 = vector.shape_cast %122 : vector<1x1x1x128xf32> to vector<1x128xf32>
    %124 = vector.broadcast %123 : vector<1x128xf32> to vector<32x128xf32>
    %125 = arith.addf %121, %124 : vector<32x128xf32>
    %cst_107 = arith.constant 0.000000e+00 : f32
    %126 = vector.broadcast %cst_107 : f32 to vector<32x128xf32>
    %127 = arith.maximumf %125, %126 : vector<32x128xf32>
    %128 = arith.truncf %127 : vector<32x128xf32> to vector<32x128xbf16>
    %c2_108 = arith.constant 2 : index
    %c2_109 = arith.constant 2 : index
    %c0_110 = arith.constant 0 : index
    %c0_111 = arith.constant 0 : index
    %129 = vector.load %arg7[%c2_108, %c2_109, %c0_110, %c0_111] : memref<4x3x128x128xbf16, #tpu.memory_space<vmem>>, vector<1x1x128x128xbf16>
    %130 = vector.shape_cast %129 : vector<1x1x128x128xbf16> to vector<128x128xbf16>
    %cst_112 = arith.constant dense<0.000000e+00> : vector<32x128xf32>
    %131 = tpu.matmul %128, %130, %cst_112 {dimension_numbers = #tpu.dot_dimension_numbers<[1], [0], [0], [1], [0, 0, 1, 1], [], []>} : vector<32x128xbf16>, vector<128x128xbf16>, vector<32x128xf32> -> vector<32x128xf32>
    %c2_113 = arith.constant 2 : index
    %c2_114 = arith.constant 2 : index
    %c0_115 = arith.constant 0 : index
    %c0_116 = arith.constant 0 : index
    %132 = vector.load %arg8[%c2_113, %c2_114, %c0_115, %c0_116] : memref<4x3x1x128xf32, #tpu.memory_space<vmem>>, vector<1x1x1x128xf32>
    %133 = vector.shape_cast %132 : vector<1x1x1x128xf32> to vector<1x128xf32>
    %134 = vector.broadcast %133 : vector<1x128xf32> to vector<32x128xf32>
    %135 = arith.addf %131, %134 : vector<32x128xf32>
    %136 = math.tanh %135 : vector<32x128xf32>
    %c2_117 = arith.constant 2 : index
    %c0_118 = arith.constant 0 : index
    %c0_119 = arith.constant 0 : index
    %137 = vector.load %arg5[%c2_117, %c0_118, %c0_119] : memref<4x16x128xbf16, #tpu.memory_space<vmem>>, vector<1x16x128xbf16>
    %138 = vector.shape_cast %137 : vector<1x16x128xbf16> to vector<16x128xbf16>
    %cst_120 = arith.constant dense<0.000000e+00> : vector<32x128xf32>
    %139 = tpu.matmul %4, %138, %cst_120 {dimension_numbers = #tpu.dot_dimension_numbers<[1], [0], [0], [1], [0, 0, 1, 1], [], []>} : vector<32x16xbf16>, vector<16x128xbf16>, vector<32x128xf32> -> vector<32x128xf32>
    %c2_121 = arith.constant 2 : index
    %c0_122 = arith.constant 0 : index
    %c0_123 = arith.constant 0 : index
    %140 = vector.load %arg6[%c2_121, %c0_122, %c0_123] : memref<4x1x128xf32, #tpu.memory_space<vmem>>, vector<1x1x128xf32>
    %141 = vector.shape_cast %140 : vector<1x1x128xf32> to vector<1x128xf32>
    %142 = vector.broadcast %141 : vector<1x128xf32> to vector<32x128xf32>
    %143 = arith.addf %139, %142 : vector<32x128xf32>
    %144 = arith.addf %143, %136 : vector<32x128xf32>
    %cst_124 = arith.constant 0.000000e+00 : f32
    %145 = vector.broadcast %cst_124 : f32 to vector<32x128xf32>
    %146 = arith.maximumf %144, %145 : vector<32x128xf32>
    %147 = vector.broadcast %5 : vector<32x1xf32> to vector<32x128xf32>
    %148 = arith.mulf %146, %147 : vector<32x128xf32>
    %149 = arith.truncf %148 : vector<32x128xf32> to vector<32x128xbf16>
    %150 = vector.extract_strided_slice %149 {offsets = [0, 0], sizes = [16, 128], strides = [1, 1]} : vector<32x128xbf16> to vector<16x128xbf16>
    %cst_125 = arith.constant dense<0.000000e+00> : vector<16x128xf32>
    %151 = tpu.matmul %1, %150, %cst_125 {dimension_numbers = #tpu.dot_dimension_numbers<[1], [0], [0], [1], [0, 0, 1, 1], [], []>} : vector<16x16xbf16>, vector<16x128xbf16>, vector<16x128xf32> -> vector<16x128xf32>
    %152 = vector.extract_strided_slice %149 {offsets = [16, 0], sizes = [16, 128], strides = [1, 1]} : vector<32x128xbf16> to vector<16x128xbf16>
    %cst_126 = arith.constant dense<0.000000e+00> : vector<16x128xf32>
    %153 = tpu.matmul %3, %152, %cst_126 {dimension_numbers = #tpu.dot_dimension_numbers<[1], [0], [0], [1], [0, 0, 1, 1], [], []>} : vector<16x16xbf16>, vector<16x128xbf16>, vector<16x128xf32> -> vector<16x128xf32>
    %154 = tpu.concatenate %151, %153 in 0 : vector<16x128xf32>, vector<16x128xf32> -> vector<32x128xf32>
    %155 = arith.truncf %154 : vector<32x128xf32> to vector<32x128xbf16>
    %c3 = arith.constant 3 : index
    %c0_127 = arith.constant 0 : index
    %c0_128 = arith.constant 0 : index
    %c0_129 = arith.constant 0 : index
    %156 = vector.load %arg7[%c3, %c0_127, %c0_128, %c0_129] : memref<4x3x128x128xbf16, #tpu.memory_space<vmem>>, vector<1x1x128x128xbf16>
    %157 = vector.shape_cast %156 : vector<1x1x128x128xbf16> to vector<128x128xbf16>
    %cst_130 = arith.constant dense<0.000000e+00> : vector<32x128xf32>
    %158 = tpu.matmul %155, %157, %cst_130 {dimension_numbers = #tpu.dot_dimension_numbers<[1], [0], [0], [1], [0, 0, 1, 1], [], []>} : vector<32x128xbf16>, vector<128x128xbf16>, vector<32x128xf32> -> vector<32x128xf32>
    %c3_131 = arith.constant 3 : index
    %c0_132 = arith.constant 0 : index
    %c0_133 = arith.constant 0 : index
    %c0_134 = arith.constant 0 : index
    %159 = vector.load %arg8[%c3_131, %c0_132, %c0_133, %c0_134] : memref<4x3x1x128xf32, #tpu.memory_space<vmem>>, vector<1x1x1x128xf32>
    %160 = vector.shape_cast %159 : vector<1x1x1x128xf32> to vector<1x128xf32>
    %161 = vector.broadcast %160 : vector<1x128xf32> to vector<32x128xf32>
    %162 = arith.addf %158, %161 : vector<32x128xf32>
    %cst_135 = arith.constant 0.000000e+00 : f32
    %163 = vector.broadcast %cst_135 : f32 to vector<32x128xf32>
    %164 = arith.maximumf %162, %163 : vector<32x128xf32>
    %165 = arith.truncf %164 : vector<32x128xf32> to vector<32x128xbf16>
    %c3_136 = arith.constant 3 : index
    %c1_137 = arith.constant 1 : index
    %c0_138 = arith.constant 0 : index
    %c0_139 = arith.constant 0 : index
    %166 = vector.load %arg7[%c3_136, %c1_137, %c0_138, %c0_139] : memref<4x3x128x128xbf16, #tpu.memory_space<vmem>>, vector<1x1x128x128xbf16>
    %167 = vector.shape_cast %166 : vector<1x1x128x128xbf16> to vector<128x128xbf16>
    %cst_140 = arith.constant dense<0.000000e+00> : vector<32x128xf32>
    %168 = tpu.matmul %165, %167, %cst_140 {dimension_numbers = #tpu.dot_dimension_numbers<[1], [0], [0], [1], [0, 0, 1, 1], [], []>} : vector<32x128xbf16>, vector<128x128xbf16>, vector<32x128xf32> -> vector<32x128xf32>
    %c3_141 = arith.constant 3 : index
    %c1_142 = arith.constant 1 : index
    %c0_143 = arith.constant 0 : index
    %c0_144 = arith.constant 0 : index
    %169 = vector.load %arg8[%c3_141, %c1_142, %c0_143, %c0_144] : memref<4x3x1x128xf32, #tpu.memory_space<vmem>>, vector<1x1x1x128xf32>
    %170 = vector.shape_cast %169 : vector<1x1x1x128xf32> to vector<1x128xf32>
    %171 = vector.broadcast %170 : vector<1x128xf32> to vector<32x128xf32>
    %172 = arith.addf %168, %171 : vector<32x128xf32>
    %cst_145 = arith.constant 0.000000e+00 : f32
    %173 = vector.broadcast %cst_145 : f32 to vector<32x128xf32>
    %174 = arith.maximumf %172, %173 : vector<32x128xf32>
    %175 = arith.truncf %174 : vector<32x128xf32> to vector<32x128xbf16>
    %c3_146 = arith.constant 3 : index
    %c2_147 = arith.constant 2 : index
    %c0_148 = arith.constant 0 : index
    %c0_149 = arith.constant 0 : index
    %176 = vector.load %arg7[%c3_146, %c2_147, %c0_148, %c0_149] : memref<4x3x128x128xbf16, #tpu.memory_space<vmem>>, vector<1x1x128x128xbf16>
    %177 = vector.shape_cast %176 : vector<1x1x128x128xbf16> to vector<128x128xbf16>
    %cst_150 = arith.constant dense<0.000000e+00> : vector<32x128xf32>
    %178 = tpu.matmul %175, %177, %cst_150 {dimension_numbers = #tpu.dot_dimension_numbers<[1], [0], [0], [1], [0, 0, 1, 1], [], []>} : vector<32x128xbf16>, vector<128x128xbf16>, vector<32x128xf32> -> vector<32x128xf32>
    %c3_151 = arith.constant 3 : index
    %c2_152 = arith.constant 2 : index
    %c0_153 = arith.constant 0 : index
    %c0_154 = arith.constant 0 : index
    %179 = vector.load %arg8[%c3_151, %c2_152, %c0_153, %c0_154] : memref<4x3x1x128xf32, #tpu.memory_space<vmem>>, vector<1x1x1x128xf32>
    %180 = vector.shape_cast %179 : vector<1x1x1x128xf32> to vector<1x128xf32>
    %181 = vector.broadcast %180 : vector<1x128xf32> to vector<32x128xf32>
    %182 = arith.addf %178, %181 : vector<32x128xf32>
    %183 = math.tanh %182 : vector<32x128xf32>
    %c3_155 = arith.constant 3 : index
    %c0_156 = arith.constant 0 : index
    %c0_157 = arith.constant 0 : index
    %184 = vector.load %arg5[%c3_155, %c0_156, %c0_157] : memref<4x16x128xbf16, #tpu.memory_space<vmem>>, vector<1x16x128xbf16>
    %185 = vector.shape_cast %184 : vector<1x16x128xbf16> to vector<16x128xbf16>
    %cst_158 = arith.constant dense<0.000000e+00> : vector<32x128xf32>
    %186 = tpu.matmul %4, %185, %cst_158 {dimension_numbers = #tpu.dot_dimension_numbers<[1], [0], [0], [1], [0, 0, 1, 1], [], []>} : vector<32x16xbf16>, vector<16x128xbf16>, vector<32x128xf32> -> vector<32x128xf32>
    %c3_159 = arith.constant 3 : index
    %c0_160 = arith.constant 0 : index
    %c0_161 = arith.constant 0 : index
    %187 = vector.load %arg6[%c3_159, %c0_160, %c0_161] : memref<4x1x128xf32, #tpu.memory_space<vmem>>, vector<1x1x128xf32>
    %188 = vector.shape_cast %187 : vector<1x1x128xf32> to vector<1x128xf32>
    %189 = vector.broadcast %188 : vector<1x128xf32> to vector<32x128xf32>
    %190 = arith.addf %186, %189 : vector<32x128xf32>
    %191 = arith.addf %190, %183 : vector<32x128xf32>
    %cst_162 = arith.constant 0.000000e+00 : f32
    %192 = vector.broadcast %cst_162 : f32 to vector<32x128xf32>
    %193 = arith.maximumf %191, %192 : vector<32x128xf32>
    %194 = vector.broadcast %5 : vector<32x1xf32> to vector<32x128xf32>
    %195 = arith.mulf %193, %194 : vector<32x128xf32>
    %c0_163 = arith.constant 0 : index
    %c0_164 = arith.constant 0 : index
    %196 = vector.load %arg3[%c0_163, %c0_164] : memref<2x32xf32, #tpu.memory_space<vmem>>, vector<2x32xf32>
    %cst_165 = arith.constant dense<0.000000e+00> : vector<2x128xf32>
    %197 = tpu.matmul %196, %195, %cst_165 {dimension_numbers = #tpu.dot_dimension_numbers<[1], [0], [0], [1], [0, 0, 1, 1], [], []>} : vector<2x32xf32>, vector<32x128xf32>, vector<2x128xf32> -> vector<2x128xf32>
    %c0_166 = arith.constant 0 : index
    %c0_167 = arith.constant 0 : index
    %198 = vector.load %arg9[%c0_166, %c0_167] : memref<128x128xf32, #tpu.memory_space<vmem>>, vector<128x128xf32>
    %cst_168 = arith.constant dense<0.000000e+00> : vector<2x128xf32>
    %199 = tpu.matmul %197, %198, %cst_168 {dimension_numbers = #tpu.dot_dimension_numbers<[1], [0], [0], [1], [0, 0, 1, 1], [], []>} : vector<2x128xf32>, vector<128x128xf32>, vector<2x128xf32> -> vector<2x128xf32>
    %c0_169 = arith.constant 0 : index
    %c0_170 = arith.constant 0 : index
    %200 = vector.load %arg10[%c0_169, %c0_170] : memref<1x128xf32, #tpu.memory_space<vmem>>, vector<1x128xf32>
    %201 = vector.broadcast %200 : vector<1x128xf32> to vector<2x128xf32>
    %202 = arith.addf %199, %201 : vector<2x128xf32>
    %c0_171 = arith.constant 0 : index
    %c0_172 = arith.constant 0 : index
    %203 = vector.load %arg11[%c0_171, %c0_172] : memref<2x128xf32, #tpu.memory_space<vmem>>, vector<2x128xf32>
    tpu.vector_store %arg11[%c0_171, %c0_172], %202 {strides = array<i32>} : memref<2x128xf32, #tpu.memory_space<vmem>>, vector<2x128xf32>,
    return
  }
}

</mosaic_0001>

<llo_original>
// kernel: siamese_forward.1
$region0: #{siamese_forward.1}
  #allocation0 [shape = 'u32[]', space=smem, size = 0x4, offset = 0x4, fixed_abs, tag = 'smem constant byte address 0x4 - core index']
  #allocation1 [shape = 'u32[144,128]{1,0:T(1,128)}', space=vmem, size = 0x12000, scoped, tag = 'internal scratch']
  %s0 = inlined_call_operand.vmem [shape: bf16[2,16,16], index: 0, kind: input, shape index: {}]
  %s1 = inlined_call_operand.vmem [shape: bf16[32,16], index: 1, kind: input, shape index: {}]
  %s2 = inlined_call_operand.vmem [shape: bf16[32,128], index: 2, kind: input, shape index: {}]
  %s3 = inlined_call_operand.vmem [shape: f32[2,32], index: 3, kind: input, shape index: {}]
  %s4 = inlined_call_operand.vmem [shape: f32[32,1], index: 4, kind: input, shape index: {}]
  %s5 = inlined_call_operand.vmem [shape: bf16[4,16,128], index: 5, kind: input, shape index: {}]
  %s6 = inlined_call_operand.vmem [shape: f32[4,1,128], index: 6, kind: input, shape index: {}]
  %s7 = inlined_call_operand.vmem [shape: bf16[4,3,128,128], index: 7, kind: input, shape index: {}]
  %s8 = inlined_call_operand.vmem [shape: f32[4,3,1,128], index: 8, kind: input, shape index: {}]
  %s9 = inlined_call_operand.vmem [shape: f32[128,128], index: 9, kind: input, shape index: {}]
  %s10 = inlined_call_operand.vmem [shape: f32[1,128], index: 10, kind: input, shape index: {}]
  %s11 = inlined_call_operand.vmem [shape: f32[2,128], index: 11, kind: output, shape index: {}]
  %s12 = sld [smem:[#allocation0]]
  $region54: #{siamese_forward.1} parent=0
    _
  %s14 = ssub.s32 1, %s12
  %s15 = scalar_select 0, %s14, %s12
  // Predicated region
  $region2: #{siamese_forward.1} parent=0 // pred_check
    _
  $region3: #{siamese_forward.1} parent=0 // pred_check_branch
    %17 = sbr.rel (0) target = $region5
  $region4: #{siamese_forward.1} parent=0 // pred_region
    _
  $region5: #{siamese_forward.1} parent=0 // pred_fallthru
    _
  // Predicated region
  $region6: #{siamese_forward.1} parent=0 // pred_check
    _
  $region7: #{siamese_forward.1} parent=0 // pred_check_branch
    %19 = sbr.rel (0) target = $region9
  $region8: #{siamese_forward.1} parent=0 // pred_region
    _
  $region9: #{siamese_forward.1} parent=0 // pred_fallthru
    _
  // Predicated region
  $region10: #{siamese_forward.1} parent=0 // pred_check
    _
  $region11: #{siamese_forward.1} parent=0 // pred_check_branch
    %21 = sbr.rel (0) target = $region13
  $region12: #{siamese_forward.1} parent=0 // pred_region
    _
  $region13: #{siamese_forward.1} parent=0 // pred_fallthru
    _
  // Predicated region
  $region14: #{siamese_forward.1} parent=0 // pred_check
    _
  $region15: #{siamese_forward.1} parent=0 // pred_check_branch
    %23 = sbr.rel (0) target = $region17
  $region16: #{siamese_forward.1} parent=0 // pred_region
    _
  $region17: #{siamese_forward.1} parent=0 // pred_fallthru
    _
  // Predicated region
  $region18: #{siamese_forward.1} parent=0 // pred_check
    _
  $region19: #{siamese_forward.1} parent=0 // pred_check_branch
    %25 = sbr.rel (0) target = $region21
  $region20: #{siamese_forward.1} parent=0 // pred_region
    _
  $region21: #{siamese_forward.1} parent=0 // pred_fallthru
    _
  // Predicated region
  $region22: #{siamese_forward.1} parent=0 // pred_check
    _
  $region23: #{siamese_forward.1} parent=0 // pred_check_branch
    %27 = sbr.rel (0) target = $region25
  $region24: #{siamese_forward.1} parent=0 // pred_region
    _
  $region25: #{siamese_forward.1} parent=0 // pred_fallthru
    _
  // Predicated region
  $region26: #{siamese_forward.1} parent=0 // pred_check
    _
  $region27: #{siamese_forward.1} parent=0 // pred_check_branch
    %29 = sbr.rel (0) target = $region29
  $region28: #{siamese_forward.1} parent=0 // pred_region
    _
  $region29: #{siamese_forward.1} parent=0 // pred_fallthru
    _
  // Predicated region
  $region30: #{siamese_forward.1} parent=0 // pred_check
    _
  $region31: #{siamese_forward.1} parent=0 // pred_check_branch
    %31 = sbr.rel (0) target = $region33
  $region32: #{siamese_forward.1} parent=0 // pred_region
    _
  $region33: #{siamese_forward.1} parent=0 // pred_fallthru
    _
  // Predicated region
  $region34: #{siamese_forward.1} parent=0 // pred_check
    _
  $region35: #{siamese_forward.1} parent=0 // pred_check_branch
    %33 = sbr.rel (0) target = $region37
  $region36: #{siamese_forward.1} parent=0 // pred_region
    _
  $region37: #{siamese_forward.1} parent=0 // pred_fallthru
    _
  // Predicated region
  $region38: #{siamese_forward.1} parent=0 // pred_check
    _
  $region39: #{siamese_forward.1} parent=0 // pred_check_branch
    %35 = sbr.rel (0) target = $region41
  $region40: #{siamese_forward.1} parent=0 // pred_region
    _
  $region41: #{siamese_forward.1} parent=0 // pred_fallthru
    _
  // Predicated region
  $region42: #{siamese_forward.1} parent=0 // pred_check
    _
  $region43: #{siamese_forward.1} parent=0 // pred_check_branch
    %37 = sbr.rel (0) target = $region45
  $region44: #{siamese_forward.1} parent=0 // pred_region
    _
  $region45: #{siamese_forward.1} parent=0 // pred_fallthru
    _
  %v39 = vld [vmem:[%s0] sm:$0xf]
  %v40 = vld [vmem:[%s0 + $0x4] sm:$0xf]
  %s41 = scalar_lea.vmem %s0, 8
  %v42 = vld [vmem:[%s41] sm:$0xf]
  %v43 = vld [vmem:[%s41 + $0x4] sm:$0xf]
  %v44 = vld [vmem:[%s1] sm:$0xf]
  %v45 = vld [vmem:[%s1 + $0x4] sm:$0xf]
  %v46 = vld [vmem:[%s1 + $0x8] sm:$0xf]
  %v47 = vld [vmem:[%s1 + $0xc] sm:$0xf]
  %v48 = vld [vmem:[%s4] sm:$0xff]
  %v49 = vld [vmem:[%s4 + $0x8] sm:$0xff]
  %v50 = vld [vmem:[%s4 + $0x10] sm:$0xff]
  %v51 = vld [vmem:[%s4 + $0x18] sm:$0xff]
  %v52 = vld [vmem:[%s2] sm:$0xf]
  %v53 = vld [vmem:[%s2 + $0x4] sm:$0xf]
  %v54 = vld [vmem:[%s2 + $0x8] sm:$0xf]
  %v55 = vld [vmem:[%s2 + $0xc] sm:$0xf]
  %v58 = vunpack.c.l.b16 %v39
  %v59 = vunpack.c.l.b16 %v40
  %v60 = vpack.c.b16 %v59, %v58
  %v63 = vunpack.c.l.b16 %v52
  %v64 = vunpack.c.l.b16 %v53
  %v65 = vpack.c.b16 %v64, %v63
  %vm67 = vcmask 130048
  %v69 = vsel %vm67, %v60, 0
  %71 = vmatprep.subr.bf16.mxu0 0
  %72 = vmatpush1.bf16.msra.mxu0 0
  %73 = vmatprep.subr.bf16.mxu0 0
  %74 = vmatpush1.bf16.msra.mxu0 0
  %75 = vmatprep.subr.bf16.mxu0 0
  %76 = vmatpush1.bf16.msra.mxu0 0
  %77 = vmatprep.subr.bf16.mxu0 0
  %78 = vmatpush1.bf16.msra.mxu0 0
  %79 = vmatprep.subr.bf16.mxu0 0
  %80 = vmatpush1.bf16.msra.mxu0 0
  %81 = vmatprep.subr.bf16.mxu0 0
  %82 = vmatpush1.bf16.msra.mxu0 0
  %83 = vmatprep.subr.bf16.mxu0 0
  %84 = vmatpush1.bf16.msra.mxu0 0
  %85 = vmatprep.subr.bf16.mxu0 0
  %86 = vmatpush1.bf16.msra.mxu0 %v65
  %87 = vmatprep.subr.bf16.mxu0 0
  %88 = vmatpush2.bf16.msra.mxu0 0
  %89 = vmatprep.subr.bf16.mxu0 0
  %90 = vmatpush2.bf16.msra.mxu0 0
  %91 = vmatprep.subr.bf16.mxu0 0
  %92 = vmatpush2.bf16.msra.mxu0 0
  %93 = vmatprep.subr.bf16.mxu0 0
  %94 = vmatpush2.bf16.msra.mxu0 0
  %95 = vmatprep.subr.bf16.mxu0 0
  %96 = vmatpush2.bf16.msra.mxu0 0
  %97 = vmatprep.subr.bf16.mxu0 0
  %98 = vmatpush2.bf16.msra.mxu0 0
  %99 = vmatprep.subr.bf16.mxu0 0
  %100 = vmatpush2.bf16.msra.mxu0 0
  %101 = vmatprep.subr.bf16.mxu0 0
  %102 = vmatpush2.bf16.msra.mxu0 0
  %103 = vmatprep.mubr.bf16.mxu0 0
  %104 = vmatmul.mubr.bf16.gmra.mxu0 %v69
  %v105 = vpop.f32.mrf.mxu0
  %v106 = vadd.f32 0.0, %v105
  %v107 = vpop.f32.mrf.mxu0
  %v108 = vpop.f32.mrf.mxu0
  %v109 = vadd.f32 0.0, %v108
  %v110 = vpop.f32.mrf.mxu0
  %111 = vdwg.mxu0
  %v114 = vunpack.c.l.b16 %v42
  %v115 = vunpack.c.l.b16 %v43
  %v116 = vpack.c.b16 %v115, %v114
  %v119 = vunpack.c.l.b16 %v54
  %v120 = vunpack.c.l.b16 %v55
  %v121 = vpack.c.b16 %v120, %v119
  %v124 = vsel %vm67, %v116, 0
  %126 = vmatprep.subr.bf16.mxu0 0
  %127 = vmatpush1.bf16.msra.mxu0 0
  %128 = vmatprep.subr.bf16.mxu0 0
  %129 = vmatpush1.bf16.msra.mxu0 0
  %130 = vmatprep.subr.bf16.mxu0 0
  %131 = vmatpush1.bf16.msra.mxu0 0
  %132 = vmatprep.subr.bf16.mxu0 0
  %133 = vmatpush1.bf16.msra.mxu0 0
  %134 = vmatprep.subr.bf16.mxu0 0
  %135 = vmatpush1.bf16.msra.mxu0 0
  %136 = vmatprep.subr.bf16.mxu0 0
  %137 = vmatpush1.bf16.msra.mxu0 0
  %138 = vmatprep.subr.bf16.mxu0 0
  %139 = vmatpush1.bf16.msra.mxu0 0
  %140 = vmatprep.subr.bf16.mxu0 0
  %141 = vmatpush1.bf16.msra.mxu0 %v121
  %142 = vmatprep.subr.bf16.mxu0 0
  %143 = vmatpush2.bf16.msra.mxu0 0
  %144 = vmatprep.subr.bf16.mxu0 0
  %145 = vmatpush2.bf16.msra.mxu0 0
  %146 = vmatprep.subr.bf16.mxu0 0
  %147 = vmatpush2.bf16.msra.mxu0 0
  %148 = vmatprep.subr.bf16.mxu0 0
  %149 = vmatpush2.bf16.msra.mxu0 0
  %150 = vmatprep.subr.bf16.mxu0 0
  %151 = vmatpush2.bf16.msra.mxu0 0
  %152 = vmatprep.subr.bf16.mxu0 0
  %153 = vmatpush2.bf16.msra.mxu0 0
  %154 = vmatprep.subr.bf16.mxu0 0
  %155 = vmatpush2.bf16.msra.mxu0 0
  %156 = vmatprep.subr.bf16.mxu0 0
  %157 = vmatpush2.bf16.msra.mxu0 0
  %158 = vmatprep.mubr.bf16.mxu0 0
  %159 = vmatmul.mubr.bf16.gmra.mxu0 %v124
  %v160 = vpop.f32.mrf.mxu0
  %v161 = vadd.f32 0.0, %v160
  %v162 = vpop.f32.mrf.mxu0
  %v163 = vpop.f32.mrf.mxu0
  %v164 = vadd.f32 0.0, %v163
  %v165 = vpop.f32.mrf.mxu0
  %166 = vdwg.mxu0
  %v167 = vpack.c.bf16 %v109, %v106
  %v168 = vpack.c.bf16 %v164, %v161
  %v169 = vld [vmem:[%s7] sm:$0xf]
  %v170 = vld [vmem:[%s7 + $0x4] sm:$0xf]
  %v171 = vld [vmem:[%s7 + $0x8] sm:$0xf]
  %v172 = vld [vmem:[%s7 + $0xc] sm:$0xf]
  %v173 = vld [vmem:[%s7 + $0x10] sm:$0xf]
  %v174 = vld [vmem:[%s7 + $0x14] sm:$0xf]
  %v175 = vld [vmem:[%s7 + $0x18] sm:$0xf]
  %v176 = vld [vmem:[%s7 + $0x1c] sm:$0xf]
  %v177 = vld [vmem:[%s7 + $0x20] sm:$0xf]
  %v178 = vld [vmem:[%s7 + $0x24] sm:$0xf]
  %v179 = vld [vmem:[%s7 + $0x28] sm:$0xf]
  %v180 = vld [vmem:[%s7 + $0x2c] sm:$0xf]
  %v181 = vld [vmem:[%s7 + $0x30] sm:$0xf]
  %v182 = vld [vmem:[%s7 + $0x34] sm:$0xf]
  %v183 = vld [vmem:[%s7 + $0x38] sm:$0xf]
  %v184 = vld [vmem:[%s7 + $0x3c] sm:$0xf]
  %v185 = vld [vmem:[%s8] sm:$0x1]
  %v187 = vlaneseq
  %v188 = vshrl.u32 %v187, 7
  %v189 = vsub.s32 0, %v188
  %v190 = vrot.slane %v185, %v189
  %v208 = vunpack.c.l.b16 %v169
  %v209 = vunpack.c.l.b16 %v170
  %v210 = vunpack.c.l.b16 %v171
  %v211 = vunpack.c.l.b16 %v172
  %v212 = vunpack.c.l.b16 %v173
  %v213 = vunpack.c.l.b16 %v174
  %v214 = vunpack.c.l.b16 %v175
  %v215 = vunpack.c.l.b16 %v176
  %v216 = vunpack.c.l.b16 %v177
  %v217 = vunpack.c.l.b16 %v178
  %v218 = vunpack.c.l.b16 %v179
  %v219 = vunpack.c.l.b16 %v180
  %v220 = vunpack.c.l.b16 %v181
  %v221 = vunpack.c.l.b16 %v182
  %v222 = vunpack.c.l.b16 %v183
  %v223 = vunpack.c.l.b16 %v184
  %v224 = vpack.c.b16 %v209, %v208
  %v225 = vpack.c.b16 %v211, %v210
  %v226 = vpack.c.b16 %v213, %v212
  %v227 = vpack.c.b16 %v215, %v214
  %v228 = vpack.c.b16 %v217, %v216
  %v229 = vpack.c.b16 %v219, %v218
  %v230 = vpack.c.b16 %v221, %v220
  %v231 = vpack.c.b16 %v223, %v222
  %240 = vmatprep.subr.bf16.mxu0 0
  %241 = vmatpush1.bf16.msra.mxu0 %v231
  %242 = vmatprep.subr.bf16.mxu0 0
  %243 = vmatpush1.bf16.msra.mxu0 %v230
  %244 = vmatprep.subr.bf16.mxu0 0
  %245 = vmatpush1.bf16.msra.mxu0 %v229
  %246 = vmatprep.subr.bf16.mxu0 0
  %247 = vmatpush1.bf16.msra.mxu0 %v228
  %248 = vmatprep.subr.bf16.mxu0 0
  %249 = vmatpush1.bf16.msra.mxu0 %v227
  %250 = vmatprep.subr.bf16.mxu0 0
  %251 = vmatpush1.bf16.msra.mxu0 %v226
  %252 = vmatprep.subr.bf16.mxu0 0
  %253 = vmatpush1.bf16.msra.mxu0 %v225
  %254 = vmatprep.subr.bf16.mxu0 0
  %255 = vmatpush1.bf16.msra.mxu0 %v224
  %256 = vmatprep.subr.bf16.mxu0 0
  %257 = vmatpush2.bf16.msra.mxu0 0
  %258 = vmatprep.subr.bf16.mxu0 0
  %259 = vmatpush2.bf16.msra.mxu0 0
  %260 = vmatprep.subr.bf16.mxu0 0
  %261 = vmatpush2.bf16.msra.mxu0 0
  %262 = vmatprep.subr.bf16.mxu0 0
  %263 = vmatpush2.bf16.msra.mxu0 0
  %264 = vmatprep.subr.bf16.mxu0 0
  %265 = vmatpush2.bf16.msra.mxu0 0
  %266 = vmatprep.subr.bf16.mxu0 0
  %267 = vmatpush2.bf16.msra.mxu0 0
  %268 = vmatprep.subr.bf16.mxu0 0
  %269 = vmatpush2.bf16.msra.mxu0 0
  %270 = vmatprep.subr.bf16.mxu0 0
  %271 = vmatpush2.bf16.msra.mxu0 0
  %272 = vmatprep.mubr.bf16.mxu0 0
  %273 = vmatmul.mubr.bf16.gmra.mxu0 %v167
  %v274 = vpop.f32.mrf.mxu0
  %v275 = vadd.f32 %v190, %v274
  %v276 = vpop.f32.mrf.mxu0
  %v277 = vpop.f32.mrf.mxu0
  %v278 = vadd.f32 %v190, %v277
  %v279 = vpop.f32.mrf.mxu0
  %280 = vmatprep.mubr.bf16.mxu0 0
  %281 = vmatmul.mubr.bf16.gmra.mxu0 %v168
  %v282 = vpop.f32.mrf.mxu0
  %v283 = vadd.f32 %v190, %v282
  %v284 = vpop.f32.mrf.mxu0
  %v285 = vpop.f32.mrf.mxu0
  %v286 = vadd.f32 %v190, %v285
  %v287 = vpop.f32.mrf.mxu0
  %288 = vdwg.mxu0
  %v289 = vmax.f32 %v275, 0.0
  %v290 = vmax.f32 %v278, 0.0
  %v291 = vmax.f32 %v283, 0.0
  %v292 = vmax.f32 %v286, 0.0
  %v293 = vpack.c.bf16 %v290, %v289
  %v294 = vpack.c.bf16 %v292, %v291
  %s295 = scalar_lea.vmem %s7, 64
  %v296 = vld [vmem:[%s295] sm:$0xf]
  %v297 = vld [vmem:[%s295 + $0x4] sm:$0xf]
  %v298 = vld [vmem:[%s295 + $0x8] sm:$0xf]
  %v299 = vld [vmem:[%s295 + $0xc] sm:$0xf]
  %v300 = vld [vmem:[%s295 + $0x10] sm:$0xf]
  %v301 = vld [vmem:[%s295 + $0x14] sm:$0xf]
  %v302 = vld [vmem:[%s295 + $0x18] sm:$0xf]
  %v303 = vld [vmem:[%s295 + $0x1c] sm:$0xf]
  %v304 = vld [vmem:[%s295 + $0x20] sm:$0xf]
  %v305 = vld [vmem:[%s295 + $0x24] sm:$0xf]
  %v306 = vld [vmem:[%s295 + $0x28] sm:$0xf]
  %v307 = vld [vmem:[%s295 + $0x2c] sm:$0xf]
  %v308 = vld [vmem:[%s295 + $0x30] sm:$0xf]
  %v309 = vld [vmem:[%s295 + $0x34] sm:$0xf]
  %v310 = vld [vmem:[%s295 + $0x38] sm:$0xf]
  %v311 = vld [vmem:[%s295 + $0x3c] sm:$0xf]
  %s312 = scalar_lea.vmem %s8, 1
  %v313 = vld [vmem:[%s312] sm:$0x1]
  %v315 = vlaneseq
  %v316 = vshrl.u32 %v315, 7
  %v317 = vsub.s32 0, %v316
  %v318 = vrot.slane %v313, %v317
  %v336 = vunpack.c.l.b16 %v296
  %v337 = vunpack.c.l.b16 %v297
  %v338 = vunpack.c.l.b16 %v298
  %v339 = vunpack.c.l.b16 %v299
  %v340 = vunpack.c.l.b16 %v300
  %v341 = vunpack.c.l.b16 %v301
  %v342 = vunpack.c.l.b16 %v302
  %v343 = vunpack.c.l.b16 %v303
  %v344 = vunpack.c.l.b16 %v304
  %v345 = vunpack.c.l.b16 %v305
  %v346 = vunpack.c.l.b16 %v306
  %v347 = vunpack.c.l.b16 %v307
  %v348 = vunpack.c.l.b16 %v308
  %v349 = vunpack.c.l.b16 %v309
  %v350 = vunpack.c.l.b16 %v310
  %v351 = vunpack.c.l.b16 %v311
  %v352 = vpack.c.b16 %v337, %v336
  %v353 = vpack.c.b16 %v339, %v338
  %v354 = vpack.c.b16 %v341, %v340
  %v355 = vpack.c.b16 %v343, %v342
  %v356 = vpack.c.b16 %v345, %v344
  %v357 = vpack.c.b16 %v347, %v346
  %v358 = vpack.c.b16 %v349, %v348
  %v359 = vpack.c.b16 %v351, %v350
  %368 = vmatprep.subr.bf16.mxu0 0
  %369 = vmatpush1.bf16.msra.mxu0 %v359
  %370 = vmatprep.subr.bf16.mxu0 0
  %371 = vmatpush1.bf16.msra.mxu0 %v358
  %372 = vmatprep.subr.bf16.mxu0 0
  %373 = vmatpush1.bf16.msra.mxu0 %v357
  %374 = vmatprep.subr.bf16.mxu0 0
  %375 = vmatpush1.bf16.msra.mxu0 %v356
  %376 = vmatprep.subr.bf16.mxu0 0
  %377 = vmatpush1.bf16.msra.mxu0 %v355
  %378 = vmatprep.subr.bf16.mxu0 0
  %379 = vmatpush1.bf16.msra.mxu0 %v354
  %380 = vmatprep.subr.bf16.mxu0 0
  %381 = vmatpush1.bf16.msra.mxu0 %v353
  %382 = vmatprep.subr.bf16.mxu0 0
  %383 = vmatpush1.bf16.msra.mxu0 %v352
  %384 = vmatprep.subr.bf16.mxu0 0
  %385 = vmatpush2.bf16.msra.mxu0 0
  %386 = vmatprep.subr.bf16.mxu0 0
  %387 = vmatpush2.bf16.msra.mxu0 0
  %388 = vmatprep.subr.bf16.mxu0 0
  %389 = vmatpush2.bf16.msra.mxu0 0
  %390 = vmatprep.subr.bf16.mxu0 0
  %391 = vmatpush2.bf16.msra.mxu0 0
  %392 = vmatprep.subr.bf16.mxu0 0
  %393 = vmatpush2.bf16.msra.mxu0 0
  %394 = vmatprep.subr.bf16.mxu0 0
  %395 = vmatpush2.bf16.msra.mxu0 0
  %396 = vmatprep.subr.bf16.mxu0 0
  %397 = vmatpush2.bf16.msra.mxu0 0
  %398 = vmatprep.subr.bf16.mxu0 0
  %399 = vmatpush2.bf16.msra.mxu0 0
  %400 = vmatprep.mubr.bf16.mxu0 0
  %401 = vmatmul.mubr.bf16.gmra.mxu0 %v293
  %v402 = vpop.f32.mrf.mxu0
  %v403 = vadd.f32 %v318, %v402
  %v404 = vpop.f32.mrf.mxu0
  %v405 = vpop.f32.mrf.mxu0
  %v406 = vadd.f32 %v318, %v405
  %v407 = vpop.f32.mrf.mxu0
  %408 = vmatprep.mubr.bf16.mxu0 0
  %409 = vmatmul.mubr.bf16.gmra.mxu0 %v294
  %v410 = vpop.f32.mrf.mxu0
  %v411 = vadd.f32 %v318, %v410
  %v412 = vpop.f32.mrf.mxu0
  %v413 = vpop.f32.mrf.mxu0
  %v414 = vadd.f32 %v318, %v413
  %v415 = vpop.f32.mrf.mxu0
  %416 = vdwg.mxu0
  %v417 = vmax.f32 %v403, 0.0
  %v418 = vmax.f32 %v406, 0.0
  %v419 = vmax.f32 %v411, 0.0
  %v420 = vmax.f32 %v414, 0.0
  %v421 = vpack.c.bf16 %v418, %v417
  %v422 = vpack.c.bf16 %v420, %v419
  %s423 = scalar_lea.vmem %s7, 128
  %v424 = vld [vmem:[%s423] sm:$0xf]
  %v425 = vld [vmem:[%s423 + $0x4] sm:$0xf]
  %v426 = vld [vmem:[%s423 + $0x8] sm:$0xf]
  %v427 = vld [vmem:[%s423 + $0xc] sm:$0xf]
  %v428 = vld [vmem:[%s423 + $0x10] sm:$0xf]
  %v429 = vld [vmem:[%s423 + $0x14] sm:$0xf]
  %v430 = vld [vmem:[%s423 + $0x18] sm:$0xf]
  %v431 = vld [vmem:[%s423 + $0x1c] sm:$0xf]
  %v432 = vld [vmem:[%s423 + $0x20] sm:$0xf]
  %v433 = vld [vmem:[%s423 + $0x24] sm:$0xf]
  %v434 = vld [vmem:[%s423 + $0x28] sm:$0xf]
  %v435 = vld [vmem:[%s423 + $0x2c] sm:$0xf]
  %v436 = vld [vmem:[%s423 + $0x30] sm:$0xf]
  %v437 = vld [vmem:[%s423 + $0x34] sm:$0xf]
  %v438 = vld [vmem:[%s423 + $0x38] sm:$0xf]
  %v439 = vld [vmem:[%s423 + $0x3c] sm:$0xf]
  %s440 = scalar_lea.vmem %s8, 2
  %v441 = vld [vmem:[%s440] sm:$0x1]
  %v443 = vlaneseq
  %v444 = vshrl.u32 %v443, 7
  %v445 = vsub.s32 0, %v444
  %v446 = vrot.slane %v441, %v445
  %v464 = vunpack.c.l.b16 %v424
  %v465 = vunpack.c.l.b16 %v425
  %v466 = vunpack.c.l.b16 %v426
  %v467 = vunpack.c.l.b16 %v427
  %v468 = vunpack.c.l.b16 %v428
  %v469 = vunpack.c.l.b16 %v429
  %v470 = vunpack.c.l.b16 %v430
  %v471 = vunpack.c.l.b16 %v431
  %v472 = vunpack.c.l.b16 %v432
  %v473 = vunpack.c.l.b16 %v433
  %v474 = vunpack.c.l.b16 %v434
  %v475 = vunpack.c.l.b16 %v435
  %v476 = vunpack.c.l.b16 %v436
  %v477 = vunpack.c.l.b16 %v437
  %v478 = vunpack.c.l.b16 %v438
  %v479 = vunpack.c.l.b16 %v439
  %v480 = vpack.c.b16 %v465, %v464
  %v481 = vpack.c.b16 %v467, %v466
  %v482 = vpack.c.b16 %v469, %v468
  %v483 = vpack.c.b16 %v471, %v470
  %v484 = vpack.c.b16 %v473, %v472
  %v485 = vpack.c.b16 %v475, %v474
  %v486 = vpack.c.b16 %v477, %v476
  %v487 = vpack.c.b16 %v479, %v478
  %496 = vmatprep.subr.bf16.mxu0 0
  %497 = vmatpush1.bf16.msra.mxu0 %v487
  %498 = vmatprep.subr.bf16.mxu0 0
  %499 = vmatpush1.bf16.msra.mxu0 %v486
  %500 = vmatprep.subr.bf16.mxu0 0
  %501 = vmatpush1.bf16.msra.mxu0 %v485
  %502 = vmatprep.subr.bf16.mxu0 0
  %503 = vmatpush1.bf16.msra.mxu0 %v484
  %504 = vmatprep.subr.bf16.mxu0 0
  %505 = vmatpush1.bf16.msra.mxu0 %v483
  %506 = vmatprep.subr.bf16.mxu0 0
  %507 = vmatpush1.bf16.msra.mxu0 %v482
  %508 = vmatprep.subr.bf16.mxu0 0
  %509 = vmatpush1.bf16.msra.mxu0 %v481
  %510 = vmatprep.subr.bf16.mxu0 0
  %511 = vmatpush1.bf16.msra.mxu0 %v480
  %512 = vmatprep.subr.bf16.mxu0 0
  %513 = vmatpush2.bf16.msra.mxu0 0
  %514 = vmatprep.subr.bf16.mxu0 0
  %515 = vmatpush2.bf16.msra.mxu0 0
  %516 = vmatprep.subr.bf16.mxu0 0
  %517 = vmatpush2.bf16.msra.mxu0 0
  %518 = vmatprep.subr.bf16.mxu0 0
  %519 = vmatpush2.bf16.msra.mxu0 0
  %520 = vmatprep.subr.bf16.mxu0 0
  %521 = vmatpush2.bf16.msra.mxu0 0
  %522 = vmatprep.subr.bf16.mxu0 0
  %523 = vmatpush2.bf16.msra.mxu0 0
  %524 = vmatprep.subr.bf16.mxu0 0
  %525 = vmatpush2.bf16.msra.mxu0 0
  %526 = vmatprep.subr.bf16.mxu0 0
  %527 = vmatpush2.bf16.msra.mxu0 0
  %528 = vmatprep.mubr.bf16.mxu0 0
  %529 = vmatmul.mubr.bf16.gmra.mxu0 %v421
  %v530 = vpop.f32.mrf.mxu0
  %v531 = vadd.f32 %v446, %v530
  %v532 = vpop.f32.mrf.mxu0
  %v533 = vpop.f32.mrf.mxu0
  %v534 = vadd.f32 %v446, %v533
  %v535 = vpop.f32.mrf.mxu0
  %536 = vmatprep.mubr.bf16.mxu0 0
  %537 = vmatmul.mubr.bf16.gmra.mxu0 %v422
  %v538 = vpop.f32.mrf.mxu0
  %v539 = vadd.f32 %v446, %v538
  %v540 = vpop.f32.mrf.mxu0
  %v541 = vpop.f32.mrf.mxu0
  %v542 = vadd.f32 %v446, %v541
  %v543 = vpop.f32.mrf.mxu0
  %544 = vdwg.mxu0
  %v545 = vtanh.pop %v531
  %v546 = vtanh.pop %v534
  %v547 = vtanh.pop %v539
  %v548 = vtanh.pop %v542
  %v549 = vld [vmem:[%s5] sm:$0xf]
  %v550 = vld [vmem:[%s5 + $0x4] sm:$0xf]
  %v551 = vld [vmem:[%s6] sm:$0x1]
  %v553 = vlaneseq
  %v554 = vshrl.u32 %v553, 7
  %v555 = vsub.s32 0, %v554
  %v556 = vrot.slane %v551, %v555
  %v562 = vunpack.c.l.b16 %v44
  %v563 = vunpack.c.l.b16 %v45
  %v564 = vunpack.c.l.b16 %v46
  %v565 = vunpack.c.l.b16 %v47
  %v566 = vpack.c.b16 %v563, %v562
  %v567 = vpack.c.b16 %v565, %v564
  %v570 = vunpack.c.l.b16 %v549
  %v571 = vunpack.c.l.b16 %v550
  %v572 = vpack.c.b16 %v571, %v570
  %v575 = vsel %vm67, %v566, 0
  %v578 = vsel %vm67, %v567, 0
  %580 = vmatprep.subr.bf16.mxu0 0
  %581 = vmatpush1.bf16.msra.mxu0 0
  %582 = vmatprep.subr.bf16.mxu0 0
  %583 = vmatpush1.bf16.msra.mxu0 0
  %584 = vmatprep.subr.bf16.mxu0 0
  %585 = vmatpush1.bf16.msra.mxu0 0
  %586 = vmatprep.subr.bf16.mxu0 0
  %587 = vmatpush1.bf16.msra.mxu0 0
  %588 = vmatprep.subr.bf16.mxu0 0
  %589 = vmatpush1.bf16.msra.mxu0 0
  %590 = vmatprep.subr.bf16.mxu0 0
  %591 = vmatpush1.bf16.msra.mxu0 0
  %592 = vmatprep.subr.bf16.mxu0 0
  %593 = vmatpush1.bf16.msra.mxu0 0
  %594 = vmatprep.subr.bf16.mxu0 0
  %595 = vmatpush1.bf16.msra.mxu0 %v572
  %596 = vmatprep.subr.bf16.mxu0 0
  %597 = vmatpush2.bf16.msra.mxu0 0
  %598 = vmatprep.subr.bf16.mxu0 0
  %599 = vmatpush2.bf16.msra.mxu0 0
  %600 = vmatprep.subr.bf16.mxu0 0
  %601 = vmatpush2.bf16.msra.mxu0 0
  %602 = vmatprep.subr.bf16.mxu0 0
  %603 = vmatpush2.bf16.msra.mxu0 0
  %604 = vmatprep.subr.bf16.mxu0 0
  %605 = vmatpush2.bf16.msra.mxu0 0
  %606 = vmatprep.subr.bf16.mxu0 0
  %607 = vmatpush2.bf16.msra.mxu0 0
  %608 = vmatprep.subr.bf16.mxu0 0
  %609 = vmatpush2.bf16.msra.mxu0 0
  %610 = vmatprep.subr.bf16.mxu0 0
  %611 = vmatpush2.bf16.msra.mxu0 0
  %612 = vmatprep.mubr.bf16.mxu0 0
  %613 = vmatmul.mubr.bf16.gmra.mxu0 %v575
  %v614 = vpop.f32.mrf.mxu0
  %v615 = vadd.f32 %v556, %v614
  %v616 = vpop.f32.mrf.mxu0
  %v617 = vpop.f32.mrf.mxu0
  %v618 = vadd.f32 %v556, %v617
  %v619 = vpop.f32.mrf.mxu0
  %620 = vmatprep.mubr.bf16.mxu0 0
  %621 = vmatmul.mubr.bf16.gmra.mxu0 %v578
  %v622 = vpop.f32.mrf.mxu0
  %v623 = vadd.f32 %v556, %v622
  %v624 = vpop.f32.mrf.mxu0
  %v625 = vpop.f32.mrf.mxu0
  %v626 = vadd.f32 %v556, %v625
  %v627 = vpop.f32.mrf.mxu0
  %628 = vdwg.mxu0
  %v629 = vadd.f32 %v615, %v545
  %v630 = vadd.f32 %v618, %v546
  %v631 = vadd.f32 %v623, %v547
  %v632 = vadd.f32 %v626, %v548
  %v633 = vmax.f32 %v629, 0.0
  %v634 = vmax.f32 %v630, 0.0
  %v635 = vmax.f32 %v631, 0.0
  %v636 = vmax.f32 %v632, 0.0
  %638 = vset.pattern.permute.xlu0 0
  %639 = vperm.xlu0 %638, %v48
  %v640 = vpop.permute.xlu0 %639
  %643 = vset.pattern.permute.xlu0 0
  %644 = vperm.xlu0 %643, %v49
  %v645 = vpop.permute.xlu0 %644
  %648 = vset.pattern.permute.xlu0 0
  %649 = vperm.xlu0 %648, %v50
  %v650 = vpop.permute.xlu0 %649
  %653 = vset.pattern.permute.xlu0 0
  %654 = vperm.xlu0 %653, %v51
  %v655 = vpop.permute.xlu0 %654
  %v657 = vmul.f32 %v633, %v640
  %v658 = vmul.f32 %v634, %v645
  %v659 = vmul.f32 %v635, %v650
  %v660 = vmul.f32 %v636, %v655
  %v661 = vpack.c.bf16 %v658, %v657
  %v662 = vpack.c.bf16 %v660, %v659
  %663 = vmatprep.subr.bf16.mxu0 0
  %664 = vmatpush1.bf16.msra.mxu0 0
  %665 = vmatprep.subr.bf16.mxu0 0
  %666 = vmatpush1.bf16.msra.mxu0 0
  %667 = vmatprep.subr.bf16.mxu0 0
  %668 = vmatpush1.bf16.msra.mxu0 0
  %669 = vmatprep.subr.bf16.mxu0 0
  %670 = vmatpush1.bf16.msra.mxu0 0
  %671 = vmatprep.subr.bf16.mxu0 0
  %672 = vmatpush1.bf16.msra.mxu0 0
  %673 = vmatprep.subr.bf16.mxu0 0
  %674 = vmatpush1.bf16.msra.mxu0 0
  %675 = vmatprep.subr.bf16.mxu0 0
  %676 = vmatpush1.bf16.msra.mxu0 0
  %677 = vmatprep.subr.bf16.mxu0 0
  %678 = vmatpush1.bf16.msra.mxu0 %v661
  %679 = vmatprep.subr.bf16.mxu0 0
  %680 = vmatpush2.bf16.msra.mxu0 0
  %681 = vmatprep.subr.bf16.mxu0 0
  %682 = vmatpush2.bf16.msra.mxu0 0
  %683 = vmatprep.subr.bf16.mxu0 0
  %684 = vmatpush2.bf16.msra.mxu0 0
  %685 = vmatprep.subr.bf16.mxu0 0
  %686 = vmatpush2.bf16.msra.mxu0 0
  %687 = vmatprep.subr.bf16.mxu0 0
  %688 = vmatpush2.bf16.msra.mxu0 0
  %689 = vmatprep.subr.bf16.mxu0 0
  %690 = vmatpush2.bf16.msra.mxu0 0
  %691 = vmatprep.subr.bf16.mxu0 0
  %692 = vmatpush2.bf16.msra.mxu0 0
  %693 = vmatprep.subr.bf16.mxu0 0
  %694 = vmatpush2.bf16.msra.mxu0 0
  %695 = vmatprep.mubr.bf16.mxu0 0
  %696 = vmatmul.mubr.bf16.gmra.mxu0 %v69
  %v697 = vpop.f32.mrf.mxu0
  %v698 = vadd.f32 0.0, %v697
  %v699 = vpop.f32.mrf.mxu0
  %v700 = vpop.f32.mrf.mxu0
  %v701 = vadd.f32 0.0, %v700
  %v702 = vpop.f32.mrf.mxu0
  %703 = vdwg.mxu0
  %704 = vmatprep.subr.bf16.mxu0 0
  %705 = vmatpush1.bf16.msra.mxu0 0
  %706 = vmatprep.subr.bf16.mxu0 0
  %707 = vmatpush1.bf16.msra.mxu0 0
  %708 = vmatprep.subr.bf16.mxu0 0
  %709 = vmatpush1.bf16.msra.mxu0 0
  %710 = vmatprep.subr.bf16.mxu0 0
  %711 = vmatpush1.bf16.msra.mxu0 0
  %712 = vmatprep.subr.bf16.mxu0 0
  %713 = vmatpush1.bf16.msra.mxu0 0
  %714 = vmatprep.subr.bf16.mxu0 0
  %715 = vmatpush1.bf16.msra.mxu0 0
  %716 = vmatprep.subr.bf16.mxu0 0
  %717 = vmatpush1.bf16.msra.mxu0 0
  %718 = vmatprep.subr.bf16.mxu0 0
  %719 = vmatpush1.bf16.msra.mxu0 %v662
  %720 = vmatprep.subr.bf16.mxu0 0
  %721 = vmatpush2.bf16.msra.mxu0 0
  %722 = vmatprep.subr.bf16.mxu0 0
  %723 = vmatpush2.bf16.msra.mxu0 0
  %724 = vmatprep.subr.bf16.mxu0 0
  %725 = vmatpush2.bf16.msra.mxu0 0
  %726 = vmatprep.subr.bf16.mxu0 0
  %727 = vmatpush2.bf16.msra.mxu0 0
  %728 = vmatprep.subr.bf16.mxu0 0
  %729 = vmatpush2.bf16.msra.mxu0 0
  %730 = vmatprep.subr.bf16.mxu0 0
  %731 = vmatpush2.bf16.msra.mxu0 0
  %732 = vmatprep.subr.bf16.mxu0 0
  %733 = vmatpush2.bf16.msra.mxu0 0
  %734 = vmatprep.subr.bf16.mxu0 0
  %735 = vmatpush2.bf16.msra.mxu0 0
  %736 = vmatprep.mubr.bf16.mxu0 0
  %737 = vmatmul.mubr.bf16.gmra.mxu0 %v124
  %v738 = vpop.f32.mrf.mxu0
  %v739 = vadd.f32 0.0, %v738
  %v740 = vpop.f32.mrf.mxu0
  %v741 = vpop.f32.mrf.mxu0
  %v742 = vadd.f32 0.0, %v741
  %v743 = vpop.f32.mrf.mxu0
  %744 = vdwg.mxu0
  %v745 = vpack.c.bf16 %v701, %v698
  %v746 = vpack.c.bf16 %v742, %v739
  %s747 = scalar_lea.vmem %s7, 192
  %v748 = vld [vmem:[%s747] sm:$0xf]
  %v749 = vld [vmem:[%s747 + $0x4] sm:$0xf]
  %v750 = vld [vmem:[%s747 + $0x8] sm:$0xf]
  %v751 = vld [vmem:[%s747 + $0xc] sm:$0xf]
  %v752 = vld [vmem:[%s747 + $0x10] sm:$0xf]
  %v753 = vld [vmem:[%s747 + $0x14] sm:$0xf]
  %v754 = vld [vmem:[%s747 + $0x18] sm:$0xf]
  %v755 = vld [vmem:[%s747 + $0x1c] sm:$0xf]
  %v756 = vld [vmem:[%s747 + $0x20] sm:$0xf]
  %v757 = vld [vmem:[%s747 + $0x24] sm:$0xf]
  %v758 = vld [vmem:[%s747 + $0x28] sm:$0xf]
  %v759 = vld [vmem:[%s747 + $0x2c] sm:$0xf]
  %v760 = vld [vmem:[%s747 + $0x30] sm:$0xf]
  %v761 = vld [vmem:[%s747 + $0x34] sm:$0xf]
  %v762 = vld [vmem:[%s747 + $0x38] sm:$0xf]
  %v763 = vld [vmem:[%s747 + $0x3c] sm:$0xf]
  %s764 = scalar_lea.vmem %s8, 3
  %v765 = vld [vmem:[%s764] sm:$0x1]
  %v767 = vlaneseq
  %v768 = vshrl.u32 %v767, 7
  %v769 = vsub.s32 0, %v768
  %v770 = vrot.slane %v765, %v769
  %v788 = vunpack.c.l.b16 %v748
  %v789 = vunpack.c.l.b16 %v749
  %v790 = vunpack.c.l.b16 %v750
  %v791 = vunpack.c.l.b16 %v751
  %v792 = vunpack.c.l.b16 %v752
  %v793 = vunpack.c.l.b16 %v753
  %v794 = vunpack.c.l.b16 %v754
  %v795 = vunpack.c.l.b16 %v755
  %v796 = vunpack.c.l.b16 %v756
  %v797 = vunpack.c.l.b16 %v757
  %v798 = vunpack.c.l.b16 %v758
  %v799 = vunpack.c.l.b16 %v759
  %v800 = vunpack.c.l.b16 %v760
  %v801 = vunpack.c.l.b16 %v761
  %v802 = vunpack.c.l.b16 %v762
  %v803 = vunpack.c.l.b16 %v763
  %v804 = vpack.c.b16 %v789, %v788
  %v805 = vpack.c.b16 %v791, %v790
  %v806 = vpack.c.b16 %v793, %v792
  %v807 = vpack.c.b16 %v795, %v794
  %v808 = vpack.c.b16 %v797, %v796
  %v809 = vpack.c.b16 %v799, %v798
  %v810 = vpack.c.b16 %v801, %v800
  %v811 = vpack.c.b16 %v803, %v802
  %820 = vmatprep.subr.bf16.mxu0 0
  %821 = vmatpush1.bf16.msra.mxu0 %v811
  %822 = vmatprep.subr.bf16.mxu0 0
  %823 = vmatpush1.bf16.msra.mxu0 %v810
  %824 = vmatprep.subr.bf16.mxu0 0
  %825 = vmatpush1.bf16.msra.mxu0 %v809
  %826 = vmatprep.subr.bf16.mxu0 0
  %827 = vmatpush1.bf16.msra.mxu0 %v808
  %828 = vmatprep.subr.bf16.mxu0 0
  %829 = vmatpush1.bf16.msra.mxu0 %v807
  %830 = vmatprep.subr.bf16.mxu0 0
  %831 = vmatpush1.bf16.msra.mxu0 %v806
  %832 = vmatprep.subr.bf16.mxu0 0
  %833 = vmatpush1.bf16.msra.mxu0 %v805
  %834 = vmatprep.subr.bf16.mxu0 0
  %835 = vmatpush1.bf16.msra.mxu0 %v804
  %836 = vmatprep.subr.bf16.mxu0 0
  %837 = vmatpush2.bf16.msra.mxu0 0
  %838 = vmatprep.subr.bf16.mxu0 0
  %839 = vmatpush2.bf16.msra.mxu0 0
  %840 = vmatprep.subr.bf16.mxu0 0
  %841 = vmatpush2.bf16.msra.mxu0 0
  %842 = vmatprep.subr.bf16.mxu0 0
  %843 = vmatpush2.bf16.msra.mxu0 0
  %844 = vmatprep.subr.bf16.mxu0 0
  %845 = vmatpush2.bf16.msra.mxu0 0
  %846 = vmatprep.subr.bf16.mxu0 0
  %847 = vmatpush2.bf16.msra.mxu0 0
  %848 = vmatprep.subr.bf16.mxu0 0
  %849 = vmatpush2.bf16.msra.mxu0 0
  %850 = vmatprep.subr.bf16.mxu0 0
  %851 = vmatpush2.bf16.msra.mxu0 0
  %852 = vmatprep.mubr.bf16.mxu0 0
  %853 = vmatmul.mubr.bf16.gmra.mxu0 %v745
  %v854 = vpop.f32.mrf.mxu0
  %v855 = vadd.f32 %v770, %v854
  %v856 = vpop.f32.mrf.mxu0
  %v857 = vpop.f32.mrf.mxu0
  %v858 = vadd.f32 %v770, %v857
  %v859 = vpop.f32.mrf.mxu0
  %860 = vmatprep.mubr.bf16.mxu0 0
  %861 = vmatmul.mubr.bf16.gmra.mxu0 %v746
  %v862 = vpop.f32.mrf.mxu0
  %v863 = vadd.f32 %v770, %v862
  %v864 = vpop.f32.mrf.mxu0
  %v865 = vpop.f32.mrf.mxu0
  %v866 = vadd.f32 %v770, %v865
  %v867 = vpop.f32.mrf.mxu0
  %868 = vdwg.mxu0
  %v869 = vmax.f32 %v855, 0.0
  %v870 = vmax.f32 %v858, 0.0
  %v871 = vmax.f32 %v863, 0.0
  %v872 = vmax.f32 %v866, 0.0
  %v873 = vpack.c.bf16 %v870, %v869
  %v874 = vpack.c.bf16 %v872, %v871
  %s875 = scalar_lea.vmem %s7, 256
  %v876 = vld [vmem:[%s875] sm:$0xf]
  %v877 = vld [vmem:[%s875 + $0x4] sm:$0xf]
  %v878 = vld [vmem:[%s875 + $0x8] sm:$0xf]
  %v879 = vld [vmem:[%s875 + $0xc] sm:$0xf]
  %v880 = vld [vmem:[%s875 + $0x10] sm:$0xf]
  %v881 = vld [vmem:[%s875 + $0x14] sm:$0xf]
  %v882 = vld [vmem:[%s875 + $0x18] sm:$0xf]
  %v883 = vld [vmem:[%s875 + $0x1c] sm:$0xf]
  %v884 = vld [vmem:[%s875 + $0x20] sm:$0xf]
  %v885 = vld [vmem:[%s875 + $0x24] sm:$0xf]
  %v886 = vld [vmem:[%s875 + $0x28] sm:$0xf]
  %v887 = vld [vmem:[%s875 + $0x2c] sm:$0xf]
  %v888 = vld [vmem:[%s875 + $0x30] sm:$0xf]
  %v889 = vld [vmem:[%s875 + $0x34] sm:$0xf]
  %v890 = vld [vmem:[%s875 + $0x38] sm:$0xf]
  %v891 = vld [vmem:[%s875 + $0x3c] sm:$0xf]
  %s892 = scalar_lea.vmem %s8, 4
  %v893 = vld [vmem:[%s892] sm:$0x1]
  %v895 = vlaneseq
  %v896 = vshrl.u32 %v895, 7
  %v897 = vsub.s32 0, %v896
  %v898 = vrot.slane %v893, %v897
  %v916 = vunpack.c.l.b16 %v876
  %v917 = vunpack.c.l.b16 %v877
  %v918 = vunpack.c.l.b16 %v878
  %v919 = vunpack.c.l.b16 %v879
  %v920 = vunpack.c.l.b16 %v880
  %v921 = vunpack.c.l.b16 %v881
  %v922 = vunpack.c.l.b16 %v882
  %v923 = vunpack.c.l.b16 %v883
  %v924 = vunpack.c.l.b16 %v884
  %v925 = vunpack.c.l.b16 %v885
  %v926 = vunpack.c.l.b16 %v886
  %v927 = vunpack.c.l.b16 %v887
  %v928 = vunpack.c.l.b16 %v888
  %v929 = vunpack.c.l.b16 %v889
  %v930 = vunpack.c.l.b16 %v890
  %v931 = vunpack.c.l.b16 %v891
  %v932 = vpack.c.b16 %v917, %v916
  %v933 = vpack.c.b16 %v919, %v918
  %v934 = vpack.c.b16 %v921, %v920
  %v935 = vpack.c.b16 %v923, %v922
  %v936 = vpack.c.b16 %v925, %v924
  %v937 = vpack.c.b16 %v927, %v926
  %v938 = vpack.c.b16 %v929, %v928
  %v939 = vpack.c.b16 %v931, %v930
  %948 = vmatprep.subr.bf16.mxu0 0
  %949 = vmatpush1.bf16.msra.mxu0 %v939
  %950 = vmatprep.subr.bf16.mxu0 0
  %951 = vmatpush1.bf16.msra.mxu0 %v938
  %952 = vmatprep.subr.bf16.mxu0 0
  %953 = vmatpush1.bf16.msra.mxu0 %v937
  %954 = vmatprep.subr.bf16.mxu0 0
  %955 = vmatpush1.bf16.msra.mxu0 %v936
  %956 = vmatprep.subr.bf16.mxu0 0
  %957 = vmatpush1.bf16.msra.mxu0 %v935
  %958 = vmatprep.subr.bf16.mxu0 0
  %959 = vmatpush1.bf16.msra.mxu0 %v934
  %960 = vmatprep.subr.bf16.mxu0 0
  %961 = vmatpush1.bf16.msra.mxu0 %v933
  %962 = vmatprep.subr.bf16.mxu0 0
  %963 = vmatpush1.bf16.msra.mxu0 %v932
  %964 = vmatprep.subr.bf16.mxu0 0
  %965 = vmatpush2.bf16.msra.mxu0 0
  %966 = vmatprep.subr.bf16.mxu0 0
  %967 = vmatpush2.bf16.msra.mxu0 0
  %968 = vmatprep.subr.bf16.mxu0 0
  %969 = vmatpush2.bf16.msra.mxu0 0
  %970 = vmatprep.subr.bf16.mxu0 0
  %971 = vmatpush2.bf16.msra.mxu0 0
  %972 = vmatprep.subr.bf16.mxu0 0
  %973 = vmatpush2.bf16.msra.mxu0 0
  %974 = vmatprep.subr.bf16.mxu0 0
  %975 = vmatpush2.bf16.msra.mxu0 0
  %976 = vmatprep.subr.bf16.mxu0 0
  %977 = vmatpush2.bf16.msra.mxu0 0
  %978 = vmatprep.subr.bf16.mxu0 0
  %979 = vmatpush2.bf16.msra.mxu0 0
  %980 = vmatprep.mubr.bf16.mxu0 0
  %981 = vmatmul.mubr.bf16.gmra.mxu0 %v873
  %v982 = vpop.f32.mrf.mxu0
  %v983 = vadd.f32 %v898, %v982
  %v984 = vpop.f32.mrf.mxu0
  %v985 = vpop.f32.mrf.mxu0
  %v986 = vadd.f32 %v898, %v985
  %v987 = vpop.f32.mrf.mxu0
  %988 = vmatprep.mubr.bf16.mxu0 0
  %989 = vmatmul.mubr.bf16.gmra.mxu0 %v874
  %v990 = vpop.f32.mrf.mxu0
  %v991 = vadd.f32 %v898, %v990
  %v992 = vpop.f32.mrf.mxu0
  %v993 = vpop.f32.mrf.mxu0
  %v994 = vadd.f32 %v898, %v993
  %v995 = vpop.f32.mrf.mxu0
  %996 = vdwg.mxu0
  %v997 = vmax.f32 %v983, 0.0
  %v998 = vmax.f32 %v986, 0.0
  %v999 = vmax.f32 %v991, 0.0
  %v1000 = vmax.f32 %v994, 0.0
  %v1001 = vpack.c.bf16 %v998, %v997
  %v1002 = vpack.c.bf16 %v1000, %v999
  %s1003 = scalar_lea.vmem %s7, 320
  %v1004 = vld [vmem:[%s1003] sm:$0xf]
  %v1005 = vld [vmem:[%s1003 + $0x4] sm:$0xf]
  %v1006 = vld [vmem:[%s1003 + $0x8] sm:$0xf]
  %v1007 = vld [vmem:[%s1003 + $0xc] sm:$0xf]
  %v1008 = vld [vmem:[%s1003 + $0x10] sm:$0xf]
  %v1009 = vld [vmem:[%s1003 + $0x14] sm:$0xf]
  %v1010 = vld [vmem:[%s1003 + $0x18] sm:$0xf]
  %v1011 = vld [vmem:[%s1003 + $0x1c] sm:$0xf]
  %v1012 = vld [vmem:[%s1003 + $0x20] sm:$0xf]
  %v1013 = vld [vmem:[%s1003 + $0x24] sm:$0xf]
  %v1014 = vld [vmem:[%s1003 + $0x28] sm:$0xf]
  %v1015 = vld [vmem:[%s1003 + $0x2c] sm:$0xf]
  %v1016 = vld [vmem:[%s1003 + $0x30] sm:$0xf]
  %v1017 = vld [vmem:[%s1003 + $0x34] sm:$0xf]
  %v1018 = vld [vmem:[%s1003 + $0x38] sm:$0xf]
  %v1019 = vld [vmem:[%s1003 + $0x3c] sm:$0xf]
  %s1020 = scalar_lea.vmem %s8, 5
  %v1021 = vld [vmem:[%s1020] sm:$0x1]
  %v1023 = vlaneseq
  %v1024 = vshrl.u32 %v1023, 7
  %v1025 = vsub.s32 0, %v1024
  %v1026 = vrot.slane %v1021, %v1025
  %v1044 = vunpack.c.l.b16 %v1004
  %v1045 = vunpack.c.l.b16 %v1005
  %v1046 = vunpack.c.l.b16 %v1006
  %v1047 = vunpack.c.l.b16 %v1007
  %v1048 = vunpack.c.l.b16 %v1008
  %v1049 = vunpack.c.l.b16 %v1009
  %v1050 = vunpack.c.l.b16 %v1010
  %v1051 = vunpack.c.l.b16 %v1011
  %v1052 = vunpack.c.l.b16 %v1012
  %v1053 = vunpack.c.l.b16 %v1013
  %v1054 = vunpack.c.l.b16 %v1014
  %v1055 = vunpack.c.l.b16 %v1015
  %v1056 = vunpack.c.l.b16 %v1016
  %v1057 = vunpack.c.l.b16 %v1017
  %v1058 = vunpack.c.l.b16 %v1018
  %v1059 = vunpack.c.l.b16 %v1019
  %v1060 = vpack.c.b16 %v1045, %v1044
  %v1061 = vpack.c.b16 %v1047, %v1046
  %v1062 = vpack.c.b16 %v1049, %v1048
  %v1063 = vpack.c.b16 %v1051, %v1050
  %v1064 = vpack.c.b16 %v1053, %v1052
  %v1065 = vpack.c.b16 %v1055, %v1054
  %v1066 = vpack.c.b16 %v1057, %v1056
  %v1067 = vpack.c.b16 %v1059, %v1058
  %1076 = vmatprep.subr.bf16.mxu0 0
  %1077 = vmatpush1.bf16.msra.mxu0 %v1067
  %1078 = vmatprep.subr.bf16.mxu0 0
  %1079 = vmatpush1.bf16.msra.mxu0 %v1066
  %1080 = vmatprep.subr.bf16.mxu0 0
  %1081 = vmatpush1.bf16.msra.mxu0 %v1065
  %1082 = vmatprep.subr.bf16.mxu0 0
  %1083 = vmatpush1.bf16.msra.mxu0 %v1064
  %1084 = vmatprep.subr.bf16.mxu0 0
  %1085 = vmatpush1.bf16.msra.mxu0 %v1063
  %1086 = vmatprep.subr.bf16.mxu0 0
  %1087 = vmatpush1.bf16.msra.mxu0 %v1062
  %1088 = vmatprep.subr.bf16.mxu0 0
  %1089 = vmatpush1.bf16.msra.mxu0 %v1061
  %1090 = vmatprep.subr.bf16.mxu0 0
  %1091 = vmatpush1.bf16.msra.mxu0 %v1060
  %1092 = vmatprep.subr.bf16.mxu0 0
  %1093 = vmatpush2.bf16.msra.mxu0 0
  %1094 = vmatprep.subr.bf16.mxu0 0
  %1095 = vmatpush2.bf16.msra.mxu0 0
  %1096 = vmatprep.subr.bf16.mxu0 0
  %1097 = vmatpush2.bf16.msra.mxu0 0
  %1098 = vmatprep.subr.bf16.mxu0 0
  %1099 = vmatpush2.bf16.msra.mxu0 0
  %1100 = vmatprep.subr.bf16.mxu0 0
  %1101 = vmatpush2.bf16.msra.mxu0 0
  %1102 = vmatprep.subr.bf16.mxu0 0
  %1103 = vmatpush2.bf16.msra.mxu0 0
  %1104 = vmatprep.subr.bf16.mxu0 0
  %1105 = vmatpush2.bf16.msra.mxu0 0
  %1106 = vmatprep.subr.bf16.mxu0 0
  %1107 = vmatpush2.bf16.msra.mxu0 0
  %1108 = vmatprep.mubr.bf16.mxu0 0
  %1109 = vmatmul.mubr.bf16.gmra.mxu0 %v1001
  %v1110 = vpop.f32.mrf.mxu0
  %v1111 = vadd.f32 %v1026, %v1110
  %v1112 = vpop.f32.mrf.mxu0
  %v1113 = vpop.f32.mrf.mxu0
  %v1114 = vadd.f32 %v1026, %v1113
  %v1115 = vpop.f32.mrf.mxu0
  %1116 = vmatprep.mubr.bf16.mxu0 0
  %1117 = vmatmul.mubr.bf16.gmra.mxu0 %v1002
  %v1118 = vpop.f32.mrf.mxu0
  %v1119 = vadd.f32 %v1026, %v1118
  %v1120 = vpop.f32.mrf.mxu0
  %v1121 = vpop.f32.mrf.mxu0
  %v1122 = vadd.f32 %v1026, %v1121
  %v1123 = vpop.f32.mrf.mxu0
  %1124 = vdwg.mxu0
  %v1125 = vtanh.pop %v1111
  %v1126 = vtanh.pop %v1114
  %v1127 = vtanh.pop %v1119
  %v1128 = vtanh.pop %v1122
  %s1129 = scalar_lea.vmem %s5, 8
  %v1130 = vld [vmem:[%s1129] sm:$0xf]
  %v1131 = vld [vmem:[%s1129 + $0x4] sm:$0xf]
  %s1132 = scalar_lea.vmem %s6, 1
  %v1133 = vld [vmem:[%s1132] sm:$0x1]
  %v1135 = vlaneseq
  %v1136 = vshrl.u32 %v1135, 7
  %v1137 = vsub.s32 0, %v1136
  %v1138 = vrot.slane %v1133, %v1137
  %v1142 = vunpack.c.l.b16 %v1130
  %v1143 = vunpack.c.l.b16 %v1131
  %v1144 = vpack.c.b16 %v1143, %v1142
  %1146 = vmatprep.subr.bf16.mxu0 0
  %1147 = vmatpush1.bf16.msra.mxu0 0
  %1148 = vmatprep.subr.bf16.mxu0 0
  %1149 = vmatpush1.bf16.msra.mxu0 0
  %1150 = vmatprep.subr.bf16.mxu0 0
  %1151 = vmatpush1.bf16.msra.mxu0 0
  %1152 = vmatprep.subr.bf16.mxu0 0
  %1153 = vmatpush1.bf16.msra.mxu0 0
  %1154 = vmatprep.subr.bf16.mxu0 0
  %1155 = vmatpush1.bf16.msra.mxu0 0
  %1156 = vmatprep.subr.bf16.mxu0 0
  %1157 = vmatpush1.bf16.msra.mxu0 0
  %1158 = vmatprep.subr.bf16.mxu0 0
  %1159 = vmatpush1.bf16.msra.mxu0 0
  %1160 = vmatprep.subr.bf16.mxu0 0
  %1161 = vmatpush1.bf16.msra.mxu0 %v1144
  %1162 = vmatprep.subr.bf16.mxu0 0
  %1163 = vmatpush2.bf16.msra.mxu0 0
  %1164 = vmatprep.subr.bf16.mxu0 0
  %1165 = vmatpush2.bf16.msra.mxu0 0
  %1166 = vmatprep.subr.bf16.mxu0 0
  %1167 = vmatpush2.bf16.msra.mxu0 0
  %1168 = vmatprep.subr.bf16.mxu0 0
  %1169 = vmatpush2.bf16.msra.mxu0 0
  %1170 = vmatprep.subr.bf16.mxu0 0
  %1171 = vmatpush2.bf16.msra.mxu0 0
  %1172 = vmatprep.subr.bf16.mxu0 0
  %1173 = vmatpush2.bf16.msra.mxu0 0
  %1174 = vmatprep.subr.bf16.mxu0 0
  %1175 = vmatpush2.bf16.msra.mxu0 0
  %1176 = vmatprep.subr.bf16.mxu0 0
  %1177 = vmatpush2.bf16.msra.mxu0 0
  %1178 = vmatprep.mubr.bf16.mxu0 0
  %1179 = vmatmul.mubr.bf16.gmra.mxu0 %v575
  %v1180 = vpop.f32.mrf.mxu0
  %v1181 = vadd.f32 %v1138, %v1180
  %v1182 = vpop.f32.mrf.mxu0
  %v1183 = vpop.f32.mrf.mxu0
  %v1184 = vadd.f32 %v1138, %v1183
  %v1185 = vpop.f32.mrf.mxu0
  %1186 = vmatprep.mubr.bf16.mxu0 0
  %1187 = vmatmul.mubr.bf16.gmra.mxu0 %v578
  %v1188 = vpop.f32.mrf.mxu0
  %v1189 = vadd.f32 %v1138, %v1188
  %v1190 = vpop.f32.mrf.mxu0
  %v1191 = vpop.f32.mrf.mxu0
  %v1192 = vadd.f32 %v1138, %v1191
  %v1193 = vpop.f32.mrf.mxu0
  %1194 = vdwg.mxu0
  %v1195 = vadd.f32 %v1181, %v1125
  %v1196 = vadd.f32 %v1184, %v1126
  %v1197 = vadd.f32 %v1189, %v1127
  %v1198 = vadd.f32 %v1192, %v1128
  %v1199 = vmax.f32 %v1195, 0.0
  %v1200 = vmax.f32 %v1196, 0.0
  %v1201 = vmax.f32 %v1197, 0.0
  %v1202 = vmax.f32 %v1198, 0.0
  %v1203 = vmul.f32 %v1199, %v640
  %v1204 = vmul.f32 %v1200, %v645
  %v1205 = vmul.f32 %v1201, %v650
  %v1206 = vmul.f32 %v1202, %v655
  %v1207 = vpack.c.bf16 %v1204, %v1203
  %v1208 = vpack.c.bf16 %v1206, %v1205
  %1209 = vmatprep.subr.bf16.mxu0 0
  %1210 = vmatpush1.bf16.msra.mxu0 0
  %1211 = vmatprep.subr.bf16.mxu0 0
  %1212 = vmatpush1.bf16.msra.mxu0 0
  %1213 = vmatprep.subr.bf16.mxu0 0
  %1214 = vmatpush1.bf16.msra.mxu0 0
  %1215 = vmatprep.subr.bf16.mxu0 0
  %1216 = vmatpush1.bf16.msra.mxu0 0
  %1217 = vmatprep.subr.bf16.mxu0 0
  %1218 = vmatpush1.bf16.msra.mxu0 0
  %1219 = vmatprep.subr.bf16.mxu0 0
  %1220 = vmatpush1.bf16.msra.mxu0 0
  %1221 = vmatprep.subr.bf16.mxu0 0
  %1222 = vmatpush1.bf16.msra.mxu0 0
  %1223 = vmatprep.subr.bf16.mxu0 0
  %1224 = vmatpush1.bf16.msra.mxu0 %v1207
  %1225 = vmatprep.subr.bf16.mxu0 0
  %1226 = vmatpush2.bf16.msra.mxu0 0
  %1227 = vmatprep.subr.bf16.mxu0 0
  %1228 = vmatpush2.bf16.msra.mxu0 0
  %1229 = vmatprep.subr.bf16.mxu0 0
  %1230 = vmatpush2.bf16.msra.mxu0 0
  %1231 = vmatprep.subr.bf16.mxu0 0
  %1232 = vmatpush2.bf16.msra.mxu0 0
  %1233 = vmatprep.subr.bf16.mxu0 0
  %1234 = vmatpush2.bf16.msra.mxu0 0
  %1235 = vmatprep.subr.bf16.mxu0 0
  %1236 = vmatpush2.bf16.msra.mxu0 0
  %1237 = vmatprep.subr.bf16.mxu0 0
  %1238 = vmatpush2.bf16.msra.mxu0 0
  %1239 = vmatprep.subr.bf16.mxu0 0
  %1240 = vmatpush2.bf16.msra.mxu0 0
  %1241 = vmatprep.mubr.bf16.mxu0 0
  %1242 = vmatmul.mubr.bf16.gmra.mxu0 %v69
  %v1243 = vpop.f32.mrf.mxu0
  %v1244 = vadd.f32 0.0, %v1243
  %v1245 = vpop.f32.mrf.mxu0
  %v1246 = vpop.f32.mrf.mxu0
  %v1247 = vadd.f32 0.0, %v1246
  %v1248 = vpop.f32.mrf.mxu0
  %1249 = vdwg.mxu0
  %1250 = vmatprep.subr.bf16.mxu0 0
  %1251 = vmatpush1.bf16.msra.mxu0 0
  %1252 = vmatprep.subr.bf16.mxu0 0
  %1253 = vmatpush1.bf16.msra.mxu0 0
  %1254 = vmatprep.subr.bf16.mxu0 0
  %1255 = vmatpush1.bf16.msra.mxu0 0
  %1256 = vmatprep.subr.bf16.mxu0 0
  %1257 = vmatpush1.bf16.msra.mxu0 0
  %1258 = vmatprep.subr.bf16.mxu0 0
  %1259 = vmatpush1.bf16.msra.mxu0 0
  %1260 = vmatprep.subr.bf16.mxu0 0
  %1261 = vmatpush1.bf16.msra.mxu0 0
  %1262 = vmatprep.subr.bf16.mxu0 0
  %1263 = vmatpush1.bf16.msra.mxu0 0
  %1264 = vmatprep.subr.bf16.mxu0 0
  %1265 = vmatpush1.bf16.msra.mxu0 %v1208
  %1266 = vmatprep.subr.bf16.mxu0 0
  %1267 = vmatpush2.bf16.msra.mxu0 0
  %1268 = vmatprep.subr.bf16.mxu0 0
  %1269 = vmatpush2.bf16.msra.mxu0 0
  %1270 = vmatprep.subr.bf16.mxu0 0
  %1271 = vmatpush2.bf16.msra.mxu0 0
  %1272 = vmatprep.subr.bf16.mxu0 0
  %1273 = vmatpush2.bf16.msra.mxu0 0
  %1274 = vmatprep.subr.bf16.mxu0 0
  %1275 = vmatpush2.bf16.msra.mxu0 0
  %1276 = vmatprep.subr.bf16.mxu0 0
  %1277 = vmatpush2.bf16.msra.mxu0 0
  %1278 = vmatprep.subr.bf16.mxu0 0
  %1279 = vmatpush2.bf16.msra.mxu0 0
  %1280 = vmatprep.subr.bf16.mxu0 0
  %1281 = vmatpush2.bf16.msra.mxu0 0
  %1282 = vmatprep.mubr.bf16.mxu0 0
  %1283 = vmatmul.mubr.bf16.gmra.mxu0 %v124
  %v1284 = vpop.f32.mrf.mxu0
  %v1285 = vadd.f32 0.0, %v1284
  %v1286 = vpop.f32.mrf.mxu0
  %v1287 = vpop.f32.mrf.mxu0
  %v1288 = vadd.f32 0.0, %v1287
  %v1289 = vpop.f32.mrf.mxu0
  %1290 = vdwg.mxu0
  %v1291 = vpack.c.bf16 %v1247, %v1244
  %v1292 = vpack.c.bf16 %v1288, %v1285
  %s1293 = scalar_lea.vmem %s7, 384
  %v1294 = vld [vmem:[%s1293] sm:$0xf]
  %v1295 = vld [vmem:[%s1293 + $0x4] sm:$0xf]
  %v1296 = vld [vmem:[%s1293 + $0x8] sm:$0xf]
  %v1297 = vld [vmem:[%s1293 + $0xc] sm:$0xf]
  %v1298 = vld [vmem:[%s1293 + $0x10] sm:$0xf]
  %v1299 = vld [vmem:[%s1293 + $0x14] sm:$0xf]
  %v1300 = vld [vmem:[%s1293 + $0x18] sm:$0xf]
  %v1301 = vld [vmem:[%s1293 + $0x1c] sm:$0xf]
  %v1302 = vld [vmem:[%s1293 + $0x20] sm:$0xf]
  %v1303 = vld [vmem:[%s1293 + $0x24] sm:$0xf]
  %v1304 = vld [vmem:[%s1293 + $0x28] sm:$0xf]
  %v1305 = vld [vmem:[%s1293 + $0x2c] sm:$0xf]
  %v1306 = vld [vmem:[%s1293 + $0x30] sm:$0xf]
  %v1307 = vld [vmem:[%s1293 + $0x34] sm:$0xf]
  %v1308 = vld [vmem:[%s1293 + $0x38] sm:$0xf]
  %v1309 = vld [vmem:[%s1293 + $0x3c] sm:$0xf]
  %s1310 = scalar_lea.vmem %s8, 6
  %v1311 = vld [vmem:[%s1310] sm:$0x1]
  %v1313 = vlaneseq
  %v1314 = vshrl.u32 %v1313, 7
  %v1315 = vsub.s32 0, %v1314
  %v1316 = vrot.slane %v1311, %v1315
  %v1334 = vunpack.c.l.b16 %v1294
  %v1335 = vunpack.c.l.b16 %v1295
  %v1336 = vunpack.c.l.b16 %v1296
  %v1337 = vunpack.c.l.b16 %v1297
  %v1338 = vunpack.c.l.b16 %v1298
  %v1339 = vunpack.c.l.b16 %v1299
  %v1340 = vunpack.c.l.b16 %v1300
  %v1341 = vunpack.c.l.b16 %v1301
  %v1342 = vunpack.c.l.b16 %v1302
  %v1343 = vunpack.c.l.b16 %v1303
  %v1344 = vunpack.c.l.b16 %v1304
  %v1345 = vunpack.c.l.b16 %v1305
  %v1346 = vunpack.c.l.b16 %v1306
  %v1347 = vunpack.c.l.b16 %v1307
  %v1348 = vunpack.c.l.b16 %v1308
  %v1349 = vunpack.c.l.b16 %v1309
  %v1350 = vpack.c.b16 %v1335, %v1334
  %v1351 = vpack.c.b16 %v1337, %v1336
  %v1352 = vpack.c.b16 %v1339, %v1338
  %v1353 = vpack.c.b16 %v1341, %v1340
  %v1354 = vpack.c.b16 %v1343, %v1342
  %v1355 = vpack.c.b16 %v1345, %v1344
  %v1356 = vpack.c.b16 %v1347, %v1346
  %v1357 = vpack.c.b16 %v1349, %v1348
  %1366 = vmatprep.subr.bf16.mxu0 0
  %1367 = vmatpush1.bf16.msra.mxu0 %v1357
  %1368 = vmatprep.subr.bf16.mxu0 0
  %1369 = vmatpush1.bf16.msra.mxu0 %v1356
  %1370 = vmatprep.subr.bf16.mxu0 0
  %1371 = vmatpush1.bf16.msra.mxu0 %v1355
  %1372 = vmatprep.subr.bf16.mxu0 0
  %1373 = vmatpush1.bf16.msra.mxu0 %v1354
  %1374 = vmatprep.subr.bf16.mxu0 0
  %1375 = vmatpush1.bf16.msra.mxu0 %v1353
  %1376 = vmatprep.subr.bf16.mxu0 0
  %1377 = vmatpush1.bf16.msra.mxu0 %v1352
  %1378 = vmatprep.subr.bf16.mxu0 0
  %1379 = vmatpush1.bf16.msra.mxu0 %v1351
  %1380 = vmatprep.subr.bf16.mxu0 0
  %1381 = vmatpush1.bf16.msra.mxu0 %v1350
  %1382 = vmatprep.subr.bf16.mxu0 0
  %1383 = vmatpush2.bf16.msra.mxu0 0
  %1384 = vmatprep.subr.bf16.mxu0 0
  %1385 = vmatpush2.bf16.msra.mxu0 0
  %1386 = vmatprep.subr.bf16.mxu0 0
  %1387 = vmatpush2.bf16.msra.mxu0 0
  %1388 = vmatprep.subr.bf16.mxu0 0
  %1389 = vmatpush2.bf16.msra.mxu0 0
  %1390 = vmatprep.subr.bf16.mxu0 0
  %1391 = vmatpush2.bf16.msra.mxu0 0
  %1392 = vmatprep.subr.bf16.mxu0 0
  %1393 = vmatpush2.bf16.msra.mxu0 0
  %1394 = vmatprep.subr.bf16.mxu0 0
  %1395 = vmatpush2.bf16.msra.mxu0 0
  %1396 = vmatprep.subr.bf16.mxu0 0
  %1397 = vmatpush2.bf16.msra.mxu0 0
  %1398 = vmatprep.mubr.bf16.mxu0 0
  %1399 = vmatmul.mubr.bf16.gmra.mxu0 %v1291
  %v1400 = vpop.f32.mrf.mxu0
  %v1401 = vadd.f32 %v1316, %v1400
  %v1402 = vpop.f32.mrf.mxu0
  %v1403 = vpop.f32.mrf.mxu0
  %v1404 = vadd.f32 %v1316, %v1403
  %v1405 = vpop.f32.mrf.mxu0
  %1406 = vmatprep.mubr.bf16.mxu0 0
  %1407 = vmatmul.mubr.bf16.gmra.mxu0 %v1292
  %v1408 = vpop.f32.mrf.mxu0
  %v1409 = vadd.f32 %v1316, %v1408
  %v1410 = vpop.f32.mrf.mxu0
  %v1411 = vpop.f32.mrf.mxu0
  %v1412 = vadd.f32 %v1316, %v1411
  %v1413 = vpop.f32.mrf.mxu0
  %1414 = vdwg.mxu0
  %v1415 = vmax.f32 %v1401, 0.0
  %v1416 = vmax.f32 %v1404, 0.0
  %v1417 = vmax.f32 %v1409, 0.0
  %v1418 = vmax.f32 %v1412, 0.0
  %v1419 = vpack.c.bf16 %v1416, %v1415
  %v1420 = vpack.c.bf16 %v1418, %v1417
  %s1421 = scalar_lea.vmem %s7, 448
  %v1422 = vld [vmem:[%s1421] sm:$0xf]
  %v1423 = vld [vmem:[%s1421 + $0x4] sm:$0xf]
  %v1424 = vld [vmem:[%s1421 + $0x8] sm:$0xf]
  %v1425 = vld [vmem:[%s1421 + $0xc] sm:$0xf]
  %v1426 = vld [vmem:[%s1421 + $0x10] sm:$0xf]
  %v1427 = vld [vmem:[%s1421 + $0x14] sm:$0xf]
  %v1428 = vld [vmem:[%s1421 + $0x18] sm:$0xf]
  %v1429 = vld [vmem:[%s1421 + $0x1c] sm:$0xf]
  %v1430 = vld [vmem:[%s1421 + $0x20] sm:$0xf]
  %v1431 = vld [vmem:[%s1421 + $0x24] sm:$0xf]
  %v1432 = vld [vmem:[%s1421 + $0x28] sm:$0xf]
  %v1433 = vld [vmem:[%s1421 + $0x2c] sm:$0xf]
  %v1434 = vld [vmem:[%s1421 + $0x30] sm:$0xf]
  %v1435 = vld [vmem:[%s1421 + $0x34] sm:$0xf]
  %v1436 = vld [vmem:[%s1421 + $0x38] sm:$0xf]
  %v1437 = vld [vmem:[%s1421 + $0x3c] sm:$0xf]
  %s1438 = scalar_lea.vmem %s8, 7
  %v1439 = vld [vmem:[%s1438] sm:$0x1]
  %v1441 = vlaneseq
  %v1442 = vshrl.u32 %v1441, 7
  %v1443 = vsub.s32 0, %v1442
  %v1444 = vrot.slane %v1439, %v1443
  %v1462 = vunpack.c.l.b16 %v1422
  %v1463 = vunpack.c.l.b16 %v1423
  %v1464 = vunpack.c.l.b16 %v1424
  %v1465 = vunpack.c.l.b16 %v1425
  %v1466 = vunpack.c.l.b16 %v1426
  %v1467 = vunpack.c.l.b16 %v1427
  %v1468 = vunpack.c.l.b16 %v1428
  %v1469 = vunpack.c.l.b16 %v1429
  %v1470 = vunpack.c.l.b16 %v1430
  %v1471 = vunpack.c.l.b16 %v1431
  %v1472 = vunpack.c.l.b16 %v1432
  %v1473 = vunpack.c.l.b16 %v1433
  %v1474 = vunpack.c.l.b16 %v1434
  %v1475 = vunpack.c.l.b16 %v1435
  %v1476 = vunpack.c.l.b16 %v1436
  %v1477 = vunpack.c.l.b16 %v1437
  %v1478 = vpack.c.b16 %v1463, %v1462
  %v1479 = vpack.c.b16 %v1465, %v1464
  %v1480 = vpack.c.b16 %v1467, %v1466
  %v1481 = vpack.c.b16 %v1469, %v1468
  %v1482 = vpack.c.b16 %v1471, %v1470
  %v1483 = vpack.c.b16 %v1473, %v1472
  %v1484 = vpack.c.b16 %v1475, %v1474
  %v1485 = vpack.c.b16 %v1477, %v1476
  %1494 = vmatprep.subr.bf16.mxu0 0
  %1495 = vmatpush1.bf16.msra.mxu0 %v1485
  %1496 = vmatprep.subr.bf16.mxu0 0
  %1497 = vmatpush1.bf16.msra.mxu0 %v1484
  %1498 = vmatprep.subr.bf16.mxu0 0
  %1499 = vmatpush1.bf16.msra.mxu0 %v1483
  %1500 = vmatprep.subr.bf16.mxu0 0
  %1501 = vmatpush1.bf16.msra.mxu0 %v1482
  %1502 = vmatprep.subr.bf16.mxu0 0
  %1503 = vmatpush1.bf16.msra.mxu0 %v1481
  %1504 = vmatprep.subr.bf16.mxu0 0
  %1505 = vmatpush1.bf16.msra.mxu0 %v1480
  %1506 = vmatprep.subr.bf16.mxu0 0
  %1507 = vmatpush1.bf16.msra.mxu0 %v1479
  %1508 = vmatprep.subr.bf16.mxu0 0
  %1509 = vmatpush1.bf16.msra.mxu0 %v1478
  %1510 = vmatprep.subr.bf16.mxu0 0
  %1511 = vmatpush2.bf16.msra.mxu0 0
  %1512 = vmatprep.subr.bf16.mxu0 0
  %1513 = vmatpush2.bf16.msra.mxu0 0
  %1514 = vmatprep.subr.bf16.mxu0 0
  %1515 = vmatpush2.bf16.msra.mxu0 0
  %1516 = vmatprep.subr.bf16.mxu0 0
  %1517 = vmatpush2.bf16.msra.mxu0 0
  %1518 = vmatprep.subr.bf16.mxu0 0
  %1519 = vmatpush2.bf16.msra.mxu0 0
  %1520 = vmatprep.subr.bf16.mxu0 0
  %1521 = vmatpush2.bf16.msra.mxu0 0
  %1522 = vmatprep.subr.bf16.mxu0 0
  %1523 = vmatpush2.bf16.msra.mxu0 0
  %1524 = vmatprep.subr.bf16.mxu0 0
  %1525 = vmatpush2.bf16.msra.mxu0 0
  %1526 = vmatprep.mubr.bf16.mxu0 0
  %1527 = vmatmul.mubr.bf16.gmra.mxu0 %v1419
  %v1528 = vpop.f32.mrf.mxu0
  %v1529 = vadd.f32 %v1444, %v1528
  %v1530 = vpop.f32.mrf.mxu0
  %v1531 = vpop.f32.mrf.mxu0
  %v1532 = vadd.f32 %v1444, %v1531
  %v1533 = vpop.f32.mrf.mxu0
  %1534 = vmatprep.mubr.bf16.mxu0 0
  %1535 = vmatmul.mubr.bf16.gmra.mxu0 %v1420
  %v1536 = vpop.f32.mrf.mxu0
  %v1537 = vadd.f32 %v1444, %v1536
  %v1538 = vpop.f32.mrf.mxu0
  %v1539 = vpop.f32.mrf.mxu0
  %v1540 = vadd.f32 %v1444, %v1539
  %v1541 = vpop.f32.mrf.mxu0
  %1542 = vdwg.mxu0
  %v1543 = vmax.f32 %v1529, 0.0
  %v1544 = vmax.f32 %v1532, 0.0
  %v1545 = vmax.f32 %v1537, 0.0
  %v1546 = vmax.f32 %v1540, 0.0
  %v1547 = vpack.c.bf16 %v1544, %v1543
  %v1548 = vpack.c.bf16 %v1546, %v1545
  %s1549 = scalar_lea.vmem %s7, 512
  %v1550 = vld [vmem:[%s1549] sm:$0xf]
  %v1551 = vld [vmem:[%s1549 + $0x4] sm:$0xf]
  %v1552 = vld [vmem:[%s1549 + $0x8] sm:$0xf]
  %v1553 = vld [vmem:[%s1549 + $0xc] sm:$0xf]
  %v1554 = vld [vmem:[%s1549 + $0x10] sm:$0xf]
  %v1555 = vld [vmem:[%s1549 + $0x14] sm:$0xf]
  %v1556 = vld [vmem:[%s1549 + $0x18] sm:$0xf]
  %v1557 = vld [vmem:[%s1549 + $0x1c] sm:$0xf]
  %v1558 = vld [vmem:[%s1549 + $0x20] sm:$0xf]
  %v1559 = vld [vmem:[%s1549 + $0x24] sm:$0xf]
  %v1560 = vld [vmem:[%s1549 + $0x28] sm:$0xf]
  %v1561 = vld [vmem:[%s1549 + $0x2c] sm:$0xf]
  %v1562 = vld [vmem:[%s1549 + $0x30] sm:$0xf]
  %v1563 = vld [vmem:[%s1549 + $0x34] sm:$0xf]
  %v1564 = vld [vmem:[%s1549 + $0x38] sm:$0xf]
  %v1565 = vld [vmem:[%s1549 + $0x3c] sm:$0xf]
  %s1566 = scalar_lea.vmem %s8, 8
  %v1567 = vld [vmem:[%s1566] sm:$0x1]
  %v1569 = vlaneseq
  %v1570 = vshrl.u32 %v1569, 7
  %v1571 = vsub.s32 0, %v1570
  %v1572 = vrot.slane %v1567, %v1571
  %v1590 = vunpack.c.l.b16 %v1550
  %v1591 = vunpack.c.l.b16 %v1551
  %v1592 = vunpack.c.l.b16 %v1552
  %v1593 = vunpack.c.l.b16 %v1553
  %v1594 = vunpack.c.l.b16 %v1554
  %v1595 = vunpack.c.l.b16 %v1555
  %v1596 = vunpack.c.l.b16 %v1556
  %v1597 = vunpack.c.l.b16 %v1557
  %v1598 = vunpack.c.l.b16 %v1558
  %v1599 = vunpack.c.l.b16 %v1559
  %v1600 = vunpack.c.l.b16 %v1560
  %v1601 = vunpack.c.l.b16 %v1561
  %v1602 = vunpack.c.l.b16 %v1562
  %v1603 = vunpack.c.l.b16 %v1563
  %v1604 = vunpack.c.l.b16 %v1564
  %v1605 = vunpack.c.l.b16 %v1565
  %v1606 = vpack.c.b16 %v1591, %v1590
  %v1607 = vpack.c.b16 %v1593, %v1592
  %v1608 = vpack.c.b16 %v1595, %v1594
  %v1609 = vpack.c.b16 %v1597, %v1596
  %v1610 = vpack.c.b16 %v1599, %v1598
  %v1611 = vpack.c.b16 %v1601, %v1600
  %v1612 = vpack.c.b16 %v1603, %v1602
  %v1613 = vpack.c.b16 %v1605, %v1604
  %1622 = vmatprep.subr.bf16.mxu0 0
  %1623 = vmatpush1.bf16.msra.mxu0 %v1613
  %1624 = vmatprep.subr.bf16.mxu0 0
  %1625 = vmatpush1.bf16.msra.mxu0 %v1612
  %1626 = vmatprep.subr.bf16.mxu0 0
  %1627 = vmatpush1.bf16.msra.mxu0 %v1611
  %1628 = vmatprep.subr.bf16.mxu0 0
  %1629 = vmatpush1.bf16.msra.mxu0 %v1610
  %1630 = vmatprep.subr.bf16.mxu0 0
  %1631 = vmatpush1.bf16.msra.mxu0 %v1609
  %1632 = vmatprep.subr.bf16.mxu0 0
  %1633 = vmatpush1.bf16.msra.mxu0 %v1608
  %1634 = vmatprep.subr.bf16.mxu0 0
  %1635 = vmatpush1.bf16.msra.mxu0 %v1607
  %1636 = vmatprep.subr.bf16.mxu0 0
  %1637 = vmatpush1.bf16.msra.mxu0 %v1606
  %1638 = vmatprep.subr.bf16.mxu0 0
  %1639 = vmatpush2.bf16.msra.mxu0 0
  %1640 = vmatprep.subr.bf16.mxu0 0
  %1641 = vmatpush2.bf16.msra.mxu0 0
  %1642 = vmatprep.subr.bf16.mxu0 0
  %1643 = vmatpush2.bf16.msra.mxu0 0
  %1644 = vmatprep.subr.bf16.mxu0 0
  %1645 = vmatpush2.bf16.msra.mxu0 0
  %1646 = vmatprep.subr.bf16.mxu0 0
  %1647 = vmatpush2.bf16.msra.mxu0 0
  %1648 = vmatprep.subr.bf16.mxu0 0
  %1649 = vmatpush2.bf16.msra.mxu0 0
  %1650 = vmatprep.subr.bf16.mxu0 0
  %1651 = vmatpush2.bf16.msra.mxu0 0
  %1652 = vmatprep.subr.bf16.mxu0 0
  %1653 = vmatpush2.bf16.msra.mxu0 0
  %1654 = vmatprep.mubr.bf16.mxu0 0
  %1655 = vmatmul.mubr.bf16.gmra.mxu0 %v1547
  %v1656 = vpop.f32.mrf.mxu0
  %v1657 = vadd.f32 %v1572, %v1656
  %v1658 = vpop.f32.mrf.mxu0
  %v1659 = vpop.f32.mrf.mxu0
  %v1660 = vadd.f32 %v1572, %v1659
  %v1661 = vpop.f32.mrf.mxu0
  %1662 = vmatprep.mubr.bf16.mxu0 0
  %1663 = vmatmul.mubr.bf16.gmra.mxu0 %v1548
  %v1664 = vpop.f32.mrf.mxu0
  %v1665 = vadd.f32 %v1572, %v1664
  %v1666 = vpop.f32.mrf.mxu0
  %v1667 = vpop.f32.mrf.mxu0
  %v1668 = vadd.f32 %v1572, %v1667
  %v1669 = vpop.f32.mrf.mxu0
  %1670 = vdwg.mxu0
  %v1671 = vtanh.pop %v1657
  %v1672 = vtanh.pop %v1660
  %v1673 = vtanh.pop %v1665
  %v1674 = vtanh.pop %v1668
  %s1675 = scalar_lea.vmem %s5, 16
  %v1676 = vld [vmem:[%s1675] sm:$0xf]
  %v1677 = vld [vmem:[%s1675 + $0x4] sm:$0xf]
  %s1678 = scalar_lea.vmem %s6, 2
  %v1679 = vld [vmem:[%s1678] sm:$0x1]
  %v1681 = vlaneseq
  %v1682 = vshrl.u32 %v1681, 7
  %v1683 = vsub.s32 0, %v1682
  %v1684 = vrot.slane %v1679, %v1683
  %v1688 = vunpack.c.l.b16 %v1676
  %v1689 = vunpack.c.l.b16 %v1677
  %v1690 = vpack.c.b16 %v1689, %v1688
  %1692 = vmatprep.subr.bf16.mxu0 0
  %1693 = vmatpush1.bf16.msra.mxu0 0
  %1694 = vmatprep.subr.bf16.mxu0 0
  %1695 = vmatpush1.bf16.msra.mxu0 0
  %1696 = vmatprep.subr.bf16.mxu0 0
  %1697 = vmatpush1.bf16.msra.mxu0 0
  %1698 = vmatprep.subr.bf16.mxu0 0
  %1699 = vmatpush1.bf16.msra.mxu0 0
  %1700 = vmatprep.subr.bf16.mxu0 0
  %1701 = vmatpush1.bf16.msra.mxu0 0
  %1702 = vmatprep.subr.bf16.mxu0 0
  %1703 = vmatpush1.bf16.msra.mxu0 0
  %1704 = vmatprep.subr.bf16.mxu0 0
  %1705 = vmatpush1.bf16.msra.mxu0 0
  %1706 = vmatprep.subr.bf16.mxu0 0
  %1707 = vmatpush1.bf16.msra.mxu0 %v1690
  %1708 = vmatprep.subr.bf16.mxu0 0
  %1709 = vmatpush2.bf16.msra.mxu0 0
  %1710 = vmatprep.subr.bf16.mxu0 0
  %1711 = vmatpush2.bf16.msra.mxu0 0
  %1712 = vmatprep.subr.bf16.mxu0 0
  %1713 = vmatpush2.bf16.msra.mxu0 0
  %1714 = vmatprep.subr.bf16.mxu0 0
  %1715 = vmatpush2.bf16.msra.mxu0 0
  %1716 = vmatprep.subr.bf16.mxu0 0
  %1717 = vmatpush2.bf16.msra.mxu0 0
  %1718 = vmatprep.subr.bf16.mxu0 0
  %1719 = vmatpush2.bf16.msra.mxu0 0
  %1720 = vmatprep.subr.bf16.mxu0 0
  %1721 = vmatpush2.bf16.msra.mxu0 0
  %1722 = vmatprep.subr.bf16.mxu0 0
  %1723 = vmatpush2.bf16.msra.mxu0 0
  %1724 = vmatprep.mubr.bf16.mxu0 0
  %1725 = vmatmul.mubr.bf16.gmra.mxu0 %v575
  %v1726 = vpop.f32.mrf.mxu0
  %v1727 = vadd.f32 %v1684, %v1726
  %v1728 = vpop.f32.mrf.mxu0
  %v1729 = vpop.f32.mrf.mxu0
  %v1730 = vadd.f32 %v1684, %v1729
  %v1731 = vpop.f32.mrf.mxu0
  %1732 = vmatprep.mubr.bf16.mxu0 0
  %1733 = vmatmul.mubr.bf16.gmra.mxu0 %v578
  %v1734 = vpop.f32.mrf.mxu0
  %v1735 = vadd.f32 %v1684, %v1734
  %v1736 = vpop.f32.mrf.mxu0
  %v1737 = vpop.f32.mrf.mxu0
  %v1738 = vadd.f32 %v1684, %v1737
  %v1739 = vpop.f32.mrf.mxu0
  %1740 = vdwg.mxu0
  %v1741 = vadd.f32 %v1727, %v1671
  %v1742 = vadd.f32 %v1730, %v1672
  %v1743 = vadd.f32 %v1735, %v1673
  %v1744 = vadd.f32 %v1738, %v1674
  %v1745 = vmax.f32 %v1741, 0.0
  %v1746 = vmax.f32 %v1742, 0.0
  %v1747 = vmax.f32 %v1743, 0.0
  %v1748 = vmax.f32 %v1744, 0.0
  %v1749 = vmul.f32 %v1745, %v640
  %v1750 = vmul.f32 %v1746, %v645
  %v1751 = vmul.f32 %v1747, %v650
  %v1752 = vmul.f32 %v1748, %v655
  %v1753 = vpack.c.bf16 %v1750, %v1749
  %v1754 = vpack.c.bf16 %v1752, %v1751
  %1755 = vmatprep.subr.bf16.mxu0 0
  %1756 = vmatpush1.bf16.msra.mxu0 0
  %1757 = vmatprep.subr.bf16.mxu0 0
  %1758 = vmatpush1.bf16.msra.mxu0 0
  %1759 = vmatprep.subr.bf16.mxu0 0
  %1760 = vmatpush1.bf16.msra.mxu0 0
  %1761 = vmatprep.subr.bf16.mxu0 0
  %1762 = vmatpush1.bf16.msra.mxu0 0
  %1763 = vmatprep.subr.bf16.mxu0 0
  %1764 = vmatpush1.bf16.msra.mxu0 0
  %1765 = vmatprep.subr.bf16.mxu0 0
  %1766 = vmatpush1.bf16.msra.mxu0 0
  %1767 = vmatprep.subr.bf16.mxu0 0
  %1768 = vmatpush1.bf16.msra.mxu0 0
  %1769 = vmatprep.subr.bf16.mxu0 0
  %1770 = vmatpush1.bf16.msra.mxu0 %v1753
  %1771 = vmatprep.subr.bf16.mxu0 0
  %1772 = vmatpush2.bf16.msra.mxu0 0
  %1773 = vmatprep.subr.bf16.mxu0 0
  %1774 = vmatpush2.bf16.msra.mxu0 0
  %1775 = vmatprep.subr.bf16.mxu0 0
  %1776 = vmatpush2.bf16.msra.mxu0 0
  %1777 = vmatprep.subr.bf16.mxu0 0
  %1778 = vmatpush2.bf16.msra.mxu0 0
  %1779 = vmatprep.subr.bf16.mxu0 0
  %1780 = vmatpush2.bf16.msra.mxu0 0
  %1781 = vmatprep.subr.bf16.mxu0 0
  %1782 = vmatpush2.bf16.msra.mxu0 0
  %1783 = vmatprep.subr.bf16.mxu0 0
  %1784 = vmatpush2.bf16.msra.mxu0 0
  %1785 = vmatprep.subr.bf16.mxu0 0
  %1786 = vmatpush2.bf16.msra.mxu0 0
  %1787 = vmatprep.mubr.bf16.mxu0 0
  %1788 = vmatmul.mubr.bf16.gmra.mxu0 %v69
  %v1789 = vpop.f32.mrf.mxu0
  %v1790 = vadd.f32 0.0, %v1789
  %v1791 = vpop.f32.mrf.mxu0
  %v1792 = vpop.f32.mrf.mxu0
  %v1793 = vadd.f32 0.0, %v1792
  %v1794 = vpop.f32.mrf.mxu0
  %1795 = vdwg.mxu0
  %1796 = vmatprep.subr.bf16.mxu0 0
  %1797 = vmatpush1.bf16.msra.mxu0 0
  %1798 = vmatprep.subr.bf16.mxu0 0
  %1799 = vmatpush1.bf16.msra.mxu0 0
  %1800 = vmatprep.subr.bf16.mxu0 0
  %1801 = vmatpush1.bf16.msra.mxu0 0
  %1802 = vmatprep.subr.bf16.mxu0 0
  %1803 = vmatpush1.bf16.msra.mxu0 0
  %1804 = vmatprep.subr.bf16.mxu0 0
  %1805 = vmatpush1.bf16.msra.mxu0 0
  %1806 = vmatprep.subr.bf16.mxu0 0
  %1807 = vmatpush1.bf16.msra.mxu0 0
  %1808 = vmatprep.subr.bf16.mxu0 0
  %1809 = vmatpush1.bf16.msra.mxu0 0
  %1810 = vmatprep.subr.bf16.mxu0 0
  %1811 = vmatpush1.bf16.msra.mxu0 %v1754
  %1812 = vmatprep.subr.bf16.mxu0 0
  %1813 = vmatpush2.bf16.msra.mxu0 0
  %1814 = vmatprep.subr.bf16.mxu0 0
  %1815 = vmatpush2.bf16.msra.mxu0 0
  %1816 = vmatprep.subr.bf16.mxu0 0
  %1817 = vmatpush2.bf16.msra.mxu0 0
  %1818 = vmatprep.subr.bf16.mxu0 0
  %1819 = vmatpush2.bf16.msra.mxu0 0
  %1820 = vmatprep.subr.bf16.mxu0 0
  %1821 = vmatpush2.bf16.msra.mxu0 0
  %1822 = vmatprep.subr.bf16.mxu0 0
  %1823 = vmatpush2.bf16.msra.mxu0 0
  %1824 = vmatprep.subr.bf16.mxu0 0
  %1825 = vmatpush2.bf16.msra.mxu0 0
  %1826 = vmatprep.subr.bf16.mxu0 0
  %1827 = vmatpush2.bf16.msra.mxu0 0
  %1828 = vmatprep.mubr.bf16.mxu0 0
  %1829 = vmatmul.mubr.bf16.gmra.mxu0 %v124
  %v1830 = vpop.f32.mrf.mxu0
  %v1831 = vadd.f32 0.0, %v1830
  %v1832 = vpop.f32.mrf.mxu0
  %v1833 = vpop.f32.mrf.mxu0
  %v1834 = vadd.f32 0.0, %v1833
  %v1835 = vpop.f32.mrf.mxu0
  %1836 = vdwg.mxu0
  %v1837 = vpack.c.bf16 %v1793, %v1790
  %v1838 = vpack.c.bf16 %v1834, %v1831
  %s1839 = scalar_lea.vmem %s7, 576
  %v1840 = vld [vmem:[%s1839] sm:$0xf]
  %v1841 = vld [vmem:[%s1839 + $0x4] sm:$0xf]
  %v1842 = vld [vmem:[%s1839 + $0x8] sm:$0xf]
  %v1843 = vld [vmem:[%s1839 + $0xc] sm:$0xf]
  %v1844 = vld [vmem:[%s1839 + $0x10] sm:$0xf]
  %v1845 = vld [vmem:[%s1839 + $0x14] sm:$0xf]
  %v1846 = vld [vmem:[%s1839 + $0x18] sm:$0xf]
  %v1847 = vld [vmem:[%s1839 + $0x1c] sm:$0xf]
  %v1848 = vld [vmem:[%s1839 + $0x20] sm:$0xf]
  %v1849 = vld [vmem:[%s1839 + $0x24] sm:$0xf]
  %v1850 = vld [vmem:[%s1839 + $0x28] sm:$0xf]
  %v1851 = vld [vmem:[%s1839 + $0x2c] sm:$0xf]
  %v1852 = vld [vmem:[%s1839 + $0x30] sm:$0xf]
  %v1853 = vld [vmem:[%s1839 + $0x34] sm:$0xf]
  %v1854 = vld [vmem:[%s1839 + $0x38] sm:$0xf]
  %v1855 = vld [vmem:[%s1839 + $0x3c] sm:$0xf]
  %s1856 = scalar_lea.vmem %s8, 9
  %v1857 = vld [vmem:[%s1856] sm:$0x1]
  %v1859 = vlaneseq
  %v1860 = vshrl.u32 %v1859, 7
  %v1861 = vsub.s32 0, %v1860
  %v1862 = vrot.slane %v1857, %v1861
  %v1880 = vunpack.c.l.b16 %v1840
  %v1881 = vunpack.c.l.b16 %v1841
  %v1882 = vunpack.c.l.b16 %v1842
  %v1883 = vunpack.c.l.b16 %v1843
  %v1884 = vunpack.c.l.b16 %v1844
  %v1885 = vunpack.c.l.b16 %v1845
  %v1886 = vunpack.c.l.b16 %v1846
  %v1887 = vunpack.c.l.b16 %v1847
  %v1888 = vunpack.c.l.b16 %v1848
  %v1889 = vunpack.c.l.b16 %v1849
  %v1890 = vunpack.c.l.b16 %v1850
  %v1891 = vunpack.c.l.b16 %v1851
  %v1892 = vunpack.c.l.b16 %v1852
  %v1893 = vunpack.c.l.b16 %v1853
  %v1894 = vunpack.c.l.b16 %v1854
  %v1895 = vunpack.c.l.b16 %v1855
  %v1896 = vpack.c.b16 %v1881, %v1880
  %v1897 = vpack.c.b16 %v1883, %v1882
  %v1898 = vpack.c.b16 %v1885, %v1884
  %v1899 = vpack.c.b16 %v1887, %v1886
  %v1900 = vpack.c.b16 %v1889, %v1888
  %v1901 = vpack.c.b16 %v1891, %v1890
  %v1902 = vpack.c.b16 %v1893, %v1892
  %v1903 = vpack.c.b16 %v1895, %v1894
  %1912 = vmatprep.subr.bf16.mxu0 0
  %1913 = vmatpush1.bf16.msra.mxu0 %v1903
  %1914 = vmatprep.subr.bf16.mxu0 0
  %1915 = vmatpush1.bf16.msra.mxu0 %v1902
  %1916 = vmatprep.subr.bf16.mxu0 0
  %1917 = vmatpush1.bf16.msra.mxu0 %v1901
  %1918 = vmatprep.subr.bf16.mxu0 0
  %1919 = vmatpush1.bf16.msra.mxu0 %v1900
  %1920 = vmatprep.subr.bf16.mxu0 0
  %1921 = vmatpush1.bf16.msra.mxu0 %v1899
  %1922 = vmatprep.subr.bf16.mxu0 0
  %1923 = vmatpush1.bf16.msra.mxu0 %v1898
  %1924 = vmatprep.subr.bf16.mxu0 0
  %1925 = vmatpush1.bf16.msra.mxu0 %v1897
  %1926 = vmatprep.subr.bf16.mxu0 0
  %1927 = vmatpush1.bf16.msra.mxu0 %v1896
  %1928 = vmatprep.subr.bf16.mxu0 0
  %1929 = vmatpush2.bf16.msra.mxu0 0
  %1930 = vmatprep.subr.bf16.mxu0 0
  %1931 = vmatpush2.bf16.msra.mxu0 0
  %1932 = vmatprep.subr.bf16.mxu0 0
  %1933 = vmatpush2.bf16.msra.mxu0 0
  %1934 = vmatprep.subr.bf16.mxu0 0
  %1935 = vmatpush2.bf16.msra.mxu0 0
  %1936 = vmatprep.subr.bf16.mxu0 0
  %1937 = vmatpush2.bf16.msra.mxu0 0
  %1938 = vmatprep.subr.bf16.mxu0 0
  %1939 = vmatpush2.bf16.msra.mxu0 0
  %1940 = vmatprep.subr.bf16.mxu0 0
  %1941 = vmatpush2.bf16.msra.mxu0 0
  %1942 = vmatprep.subr.bf16.mxu0 0
  %1943 = vmatpush2.bf16.msra.mxu0 0
  %1944 = vmatprep.mubr.bf16.mxu0 0
  %1945 = vmatmul.mubr.bf16.gmra.mxu0 %v1837
  %v1946 = vpop.f32.mrf.mxu0
  %v1947 = vadd.f32 %v1862, %v1946
  %v1948 = vpop.f32.mrf.mxu0
  %v1949 = vpop.f32.mrf.mxu0
  %v1950 = vadd.f32 %v1862, %v1949
  %v1951 = vpop.f32.mrf.mxu0
  %1952 = vmatprep.mubr.bf16.mxu0 0
  %1953 = vmatmul.mubr.bf16.gmra.mxu0 %v1838
  %v1954 = vpop.f32.mrf.mxu0
  %v1955 = vadd.f32 %v1862, %v1954
  %v1956 = vpop.f32.mrf.mxu0
  %v1957 = vpop.f32.mrf.mxu0
  %v1958 = vadd.f32 %v1862, %v1957
  %v1959 = vpop.f32.mrf.mxu0
  %1960 = vdwg.mxu0
  %v1961 = vmax.f32 %v1947, 0.0
  %v1962 = vmax.f32 %v1950, 0.0
  %v1963 = vmax.f32 %v1955, 0.0
  %v1964 = vmax.f32 %v1958, 0.0
  %v1965 = vpack.c.bf16 %v1962, %v1961
  %v1966 = vpack.c.bf16 %v1964, %v1963
  %s1967 = scalar_lea.vmem %s7, 640
  %v1968 = vld [vmem:[%s1967] sm:$0xf]
  %v1969 = vld [vmem:[%s1967 + $0x4] sm:$0xf]
  %v1970 = vld [vmem:[%s1967 + $0x8] sm:$0xf]
  %v1971 = vld [vmem:[%s1967 + $0xc] sm:$0xf]
  %v1972 = vld [vmem:[%s1967 + $0x10] sm:$0xf]
  %v1973 = vld [vmem:[%s1967 + $0x14] sm:$0xf]
  %v1974 = vld [vmem:[%s1967 + $0x18] sm:$0xf]
  %v1975 = vld [vmem:[%s1967 + $0x1c] sm:$0xf]
  %v1976 = vld [vmem:[%s1967 + $0x20] sm:$0xf]
  %v1977 = vld [vmem:[%s1967 + $0x24] sm:$0xf]
  %v1978 = vld [vmem:[%s1967 + $0x28] sm:$0xf]
  %v1979 = vld [vmem:[%s1967 + $0x2c] sm:$0xf]
  %v1980 = vld [vmem:[%s1967 + $0x30] sm:$0xf]
  %v1981 = vld [vmem:[%s1967 + $0x34] sm:$0xf]
  %v1982 = vld [vmem:[%s1967 + $0x38] sm:$0xf]
  %v1983 = vld [vmem:[%s1967 + $0x3c] sm:$0xf]
  %s1984 = scalar_lea.vmem %s8, 10
  %v1985 = vld [vmem:[%s1984] sm:$0x1]
  %v1987 = vlaneseq
  %v1988 = vshrl.u32 %v1987, 7
  %v1989 = vsub.s32 0, %v1988
  %v1990 = vrot.slane %v1985, %v1989
  %v2008 = vunpack.c.l.b16 %v1968
  %v2009 = vunpack.c.l.b16 %v1969
  %v2010 = vunpack.c.l.b16 %v1970
  %v2011 = vunpack.c.l.b16 %v1971
  %v2012 = vunpack.c.l.b16 %v1972
  %v2013 = vunpack.c.l.b16 %v1973
  %v2014 = vunpack.c.l.b16 %v1974
  %v2015 = vunpack.c.l.b16 %v1975
  %v2016 = vunpack.c.l.b16 %v1976
  %v2017 = vunpack.c.l.b16 %v1977
  %v2018 = vunpack.c.l.b16 %v1978
  %v2019 = vunpack.c.l.b16 %v1979
  %v2020 = vunpack.c.l.b16 %v1980
  %v2021 = vunpack.c.l.b16 %v1981
  %v2022 = vunpack.c.l.b16 %v1982
  %v2023 = vunpack.c.l.b16 %v1983
  %v2024 = vpack.c.b16 %v2009, %v2008
  %v2025 = vpack.c.b16 %v2011, %v2010
  %v2026 = vpack.c.b16 %v2013, %v2012
  %v2027 = vpack.c.b16 %v2015, %v2014
  %v2028 = vpack.c.b16 %v2017, %v2016
  %v2029 = vpack.c.b16 %v2019, %v2018
  %v2030 = vpack.c.b16 %v2021, %v2020
  %v2031 = vpack.c.b16 %v2023, %v2022
  %2040 = vmatprep.subr.bf16.mxu0 0
  %2041 = vmatpush1.bf16.msra.mxu0 %v2031
  %2042 = vmatprep.subr.bf16.mxu0 0
  %2043 = vmatpush1.bf16.msra.mxu0 %v2030
  %2044 = vmatprep.subr.bf16.mxu0 0
  %2045 = vmatpush1.bf16.msra.mxu0 %v2029
  %2046 = vmatprep.subr.bf16.mxu0 0
  %2047 = vmatpush1.bf16.msra.mxu0 %v2028
  %2048 = vmatprep.subr.bf16.mxu0 0
  %2049 = vmatpush1.bf16.msra.mxu0 %v2027
  %2050 = vmatprep.subr.bf16.mxu0 0
  %2051 = vmatpush1.bf16.msra.mxu0 %v2026
  %2052 = vmatprep.subr.bf16.mxu0 0
  %2053 = vmatpush1.bf16.msra.mxu0 %v2025
  %2054 = vmatprep.subr.bf16.mxu0 0
  %2055 = vmatpush1.bf16.msra.mxu0 %v2024
  %2056 = vmatprep.subr.bf16.mxu0 0
  %2057 = vmatpush2.bf16.msra.mxu0 0
  %2058 = vmatprep.subr.bf16.mxu0 0
  %2059 = vmatpush2.bf16.msra.mxu0 0
  %2060 = vmatprep.subr.bf16.mxu0 0
  %2061 = vmatpush2.bf16.msra.mxu0 0
  %2062 = vmatprep.subr.bf16.mxu0 0
  %2063 = vmatpush2.bf16.msra.mxu0 0
  %2064 = vmatprep.subr.bf16.mxu0 0
  %2065 = vmatpush2.bf16.msra.mxu0 0
  %2066 = vmatprep.subr.bf16.mxu0 0
  %2067 = vmatpush2.bf16.msra.mxu0 0
  %2068 = vmatprep.subr.bf16.mxu0 0
  %2069 = vmatpush2.bf16.msra.mxu0 0
  %2070 = vmatprep.subr.bf16.mxu0 0
  %2071 = vmatpush2.bf16.msra.mxu0 0
  %2072 = vmatprep.mubr.bf16.mxu0 0
  %2073 = vmatmul.mubr.bf16.gmra.mxu0 %v1965
  %v2074 = vpop.f32.mrf.mxu0
  %v2075 = vadd.f32 %v1990, %v2074
  %v2076 = vpop.f32.mrf.mxu0
  %v2077 = vpop.f32.mrf.mxu0
  %v2078 = vadd.f32 %v1990, %v2077
  %v2079 = vpop.f32.mrf.mxu0
  %2080 = vmatprep.mubr.bf16.mxu0 0
  %2081 = vmatmul.mubr.bf16.gmra.mxu0 %v1966
  %v2082 = vpop.f32.mrf.mxu0
  %v2083 = vadd.f32 %v1990, %v2082
  %v2084 = vpop.f32.mrf.mxu0
  %v2085 = vpop.f32.mrf.mxu0
  %v2086 = vadd.f32 %v1990, %v2085
  %v2087 = vpop.f32.mrf.mxu0
  %2088 = vdwg.mxu0
  %v2089 = vmax.f32 %v2075, 0.0
  %v2090 = vmax.f32 %v2078, 0.0
  %v2091 = vmax.f32 %v2083, 0.0
  %v2092 = vmax.f32 %v2086, 0.0
  %v2093 = vpack.c.bf16 %v2090, %v2089
  %v2094 = vpack.c.bf16 %v2092, %v2091
  %s2095 = scalar_lea.vmem %s7, 704
  %v2096 = vld [vmem:[%s2095] sm:$0xf]
  %v2097 = vld [vmem:[%s2095 + $0x4] sm:$0xf]
  %v2098 = vld [vmem:[%s2095 + $0x8] sm:$0xf]
  %v2099 = vld [vmem:[%s2095 + $0xc] sm:$0xf]
  %v2100 = vld [vmem:[%s2095 + $0x10] sm:$0xf]
  %v2101 = vld [vmem:[%s2095 + $0x14] sm:$0xf]
  %v2102 = vld [vmem:[%s2095 + $0x18] sm:$0xf]
  %v2103 = vld [vmem:[%s2095 + $0x1c] sm:$0xf]
  %v2104 = vld [vmem:[%s2095 + $0x20] sm:$0xf]
  %v2105 = vld [vmem:[%s2095 + $0x24] sm:$0xf]
  %v2106 = vld [vmem:[%s2095 + $0x28] sm:$0xf]
  %v2107 = vld [vmem:[%s2095 + $0x2c] sm:$0xf]
  %v2108 = vld [vmem:[%s2095 + $0x30] sm:$0xf]
  %v2109 = vld [vmem:[%s2095 + $0x34] sm:$0xf]
  %v2110 = vld [vmem:[%s2095 + $0x38] sm:$0xf]
  %v2111 = vld [vmem:[%s2095 + $0x3c] sm:$0xf]
  %s2112 = scalar_lea.vmem %s8, 11
  %v2113 = vld [vmem:[%s2112] sm:$0x1]
  %v2115 = vlaneseq
  %v2116 = vshrl.u32 %v2115, 7
  %v2117 = vsub.s32 0, %v2116
  %v2118 = vrot.slane %v2113, %v2117
  %v2136 = vunpack.c.l.b16 %v2096
  %v2137 = vunpack.c.l.b16 %v2097
  %v2138 = vunpack.c.l.b16 %v2098
  %v2139 = vunpack.c.l.b16 %v2099
  %v2140 = vunpack.c.l.b16 %v2100
  %v2141 = vunpack.c.l.b16 %v2101
  %v2142 = vunpack.c.l.b16 %v2102
  %v2143 = vunpack.c.l.b16 %v2103
  %v2144 = vunpack.c.l.b16 %v2104
  %v2145 = vunpack.c.l.b16 %v2105
  %v2146 = vunpack.c.l.b16 %v2106
  %v2147 = vunpack.c.l.b16 %v2107
  %v2148 = vunpack.c.l.b16 %v2108
  %v2149 = vunpack.c.l.b16 %v2109
  %v2150 = vunpack.c.l.b16 %v2110
  %v2151 = vunpack.c.l.b16 %v2111
  %v2152 = vpack.c.b16 %v2137, %v2136
  %v2153 = vpack.c.b16 %v2139, %v2138
  %v2154 = vpack.c.b16 %v2141, %v2140
  %v2155 = vpack.c.b16 %v2143, %v2142
  %v2156 = vpack.c.b16 %v2145, %v2144
  %v2157 = vpack.c.b16 %v2147, %v2146
  %v2158 = vpack.c.b16 %v2149, %v2148
  %v2159 = vpack.c.b16 %v2151, %v2150
  %2168 = vmatprep.subr.bf16.mxu0 0
  %2169 = vmatpush1.bf16.msra.mxu0 %v2159
  %2170 = vmatprep.subr.bf16.mxu0 0
  %2171 = vmatpush1.bf16.msra.mxu0 %v2158
  %2172 = vmatprep.subr.bf16.mxu0 0
  %2173 = vmatpush1.bf16.msra.mxu0 %v2157
  %2174 = vmatprep.subr.bf16.mxu0 0
  %2175 = vmatpush1.bf16.msra.mxu0 %v2156
  %2176 = vmatprep.subr.bf16.mxu0 0
  %2177 = vmatpush1.bf16.msra.mxu0 %v2155
  %2178 = vmatprep.subr.bf16.mxu0 0
  %2179 = vmatpush1.bf16.msra.mxu0 %v2154
  %2180 = vmatprep.subr.bf16.mxu0 0
  %2181 = vmatpush1.bf16.msra.mxu0 %v2153
  %2182 = vmatprep.subr.bf16.mxu0 0
  %2183 = vmatpush1.bf16.msra.mxu0 %v2152
  %2184 = vmatprep.subr.bf16.mxu0 0
  %2185 = vmatpush2.bf16.msra.mxu0 0
  %2186 = vmatprep.subr.bf16.mxu0 0
  %2187 = vmatpush2.bf16.msra.mxu0 0
  %2188 = vmatprep.subr.bf16.mxu0 0
  %2189 = vmatpush2.bf16.msra.mxu0 0
  %2190 = vmatprep.subr.bf16.mxu0 0
  %2191 = vmatpush2.bf16.msra.mxu0 0
  %2192 = vmatprep.subr.bf16.mxu0 0
  %2193 = vmatpush2.bf16.msra.mxu0 0
  %2194 = vmatprep.subr.bf16.mxu0 0
  %2195 = vmatpush2.bf16.msra.mxu0 0
  %2196 = vmatprep.subr.bf16.mxu0 0
  %2197 = vmatpush2.bf16.msra.mxu0 0
  %2198 = vmatprep.subr.bf16.mxu0 0
  %2199 = vmatpush2.bf16.msra.mxu0 0
  %2200 = vmatprep.mubr.bf16.mxu0 0
  %2201 = vmatmul.mubr.bf16.gmra.mxu0 %v2093
  %v2202 = vpop.f32.mrf.mxu0
  %v2203 = vadd.f32 %v2118, %v2202
  %v2204 = vpop.f32.mrf.mxu0
  %v2205 = vpop.f32.mrf.mxu0
  %v2206 = vadd.f32 %v2118, %v2205
  %v2207 = vpop.f32.mrf.mxu0
  %2208 = vmatprep.mubr.bf16.mxu0 0
  %2209 = vmatmul.mubr.bf16.gmra.mxu0 %v2094
  %v2210 = vpop.f32.mrf.mxu0
  %v2211 = vadd.f32 %v2118, %v2210
  %v2212 = vpop.f32.mrf.mxu0
  %v2213 = vpop.f32.mrf.mxu0
  %v2214 = vadd.f32 %v2118, %v2213
  %v2215 = vpop.f32.mrf.mxu0
  %2216 = vdwg.mxu0
  %v2217 = vtanh.pop %v2203
  %v2218 = vtanh.pop %v2206
  %v2219 = vtanh.pop %v2211
  %v2220 = vtanh.pop %v2214
  %s2221 = scalar_lea.vmem %s5, 24
  %v2222 = vld [vmem:[%s2221] sm:$0xf]
  %v2223 = vld [vmem:[%s2221 + $0x4] sm:$0xf]
  %s2224 = scalar_lea.vmem %s6, 3
  %v2225 = vld [vmem:[%s2224] sm:$0x1]
  %v2227 = vlaneseq
  %v2228 = vshrl.u32 %v2227, 7
  %v2229 = vsub.s32 0, %v2228
  %v2230 = vrot.slane %v2225, %v2229
  %v2234 = vunpack.c.l.b16 %v2222
  %v2235 = vunpack.c.l.b16 %v2223
  %v2236 = vpack.c.b16 %v2235, %v2234
  %2238 = vmatprep.subr.bf16.mxu0 0
  %2239 = vmatpush1.bf16.msra.mxu0 0
  %2240 = vmatprep.subr.bf16.mxu0 0
  %2241 = vmatpush1.bf16.msra.mxu0 0
  %2242 = vmatprep.subr.bf16.mxu0 0
  %2243 = vmatpush1.bf16.msra.mxu0 0
  %2244 = vmatprep.subr.bf16.mxu0 0
  %2245 = vmatpush1.bf16.msra.mxu0 0
  %2246 = vmatprep.subr.bf16.mxu0 0
  %2247 = vmatpush1.bf16.msra.mxu0 0
  %2248 = vmatprep.subr.bf16.mxu0 0
  %2249 = vmatpush1.bf16.msra.mxu0 0
  %2250 = vmatprep.subr.bf16.mxu0 0
  %2251 = vmatpush1.bf16.msra.mxu0 0
  %2252 = vmatprep.subr.bf16.mxu0 0
  %2253 = vmatpush1.bf16.msra.mxu0 %v2236
  %2254 = vmatprep.subr.bf16.mxu0 0
  %2255 = vmatpush2.bf16.msra.mxu0 0
  %2256 = vmatprep.subr.bf16.mxu0 0
  %2257 = vmatpush2.bf16.msra.mxu0 0
  %2258 = vmatprep.subr.bf16.mxu0 0
  %2259 = vmatpush2.bf16.msra.mxu0 0
  %2260 = vmatprep.subr.bf16.mxu0 0
  %2261 = vmatpush2.bf16.msra.mxu0 0
  %2262 = vmatprep.subr.bf16.mxu0 0
  %2263 = vmatpush2.bf16.msra.mxu0 0
  %2264 = vmatprep.subr.bf16.mxu0 0
  %2265 = vmatpush2.bf16.msra.mxu0 0
  %2266 = vmatprep.subr.bf16.mxu0 0
  %2267 = vmatpush2.bf16.msra.mxu0 0
  %2268 = vmatprep.subr.bf16.mxu0 0
  %2269 = vmatpush2.bf16.msra.mxu0 0
  %2270 = vmatprep.mubr.bf16.mxu0 0
  %2271 = vmatmul.mubr.bf16.gmra.mxu0 %v575
  %v2272 = vpop.f32.mrf.mxu0
  %v2273 = vadd.f32 %v2230, %v2272
  %v2274 = vpop.f32.mrf.mxu0
  %v2275 = vpop.f32.mrf.mxu0
  %v2276 = vadd.f32 %v2230, %v2275
  %v2277 = vpop.f32.mrf.mxu0
  %2278 = vmatprep.mubr.bf16.mxu0 0
  %2279 = vmatmul.mubr.bf16.gmra.mxu0 %v578
  %v2280 = vpop.f32.mrf.mxu0
  %v2281 = vadd.f32 %v2230, %v2280
  %v2282 = vpop.f32.mrf.mxu0
  %v2283 = vpop.f32.mrf.mxu0
  %v2284 = vadd.f32 %v2230, %v2283
  %v2285 = vpop.f32.mrf.mxu0
  %2286 = vdwg.mxu0
  %v2287 = vadd.f32 %v2273, %v2217
  %v2288 = vadd.f32 %v2276, %v2218
  %v2289 = vadd.f32 %v2281, %v2219
  %v2290 = vadd.f32 %v2284, %v2220
  %v2291 = vmax.f32 %v2287, 0.0
  %v2292 = vmax.f32 %v2288, 0.0
  %v2293 = vmax.f32 %v2289, 0.0
  %v2294 = vmax.f32 %v2290, 0.0
  %v2295 = vmul.f32 %v2291, %v640
  %v2296 = vmul.f32 %v2292, %v645
  %v2297 = vmul.f32 %v2293, %v650
  %v2298 = vmul.f32 %v2294, %v655
  %v2299 = vld [vmem:[%s3] sm:$0x3]
  %vm2300 = vcmask 261120
  %v2302 = vsel %vm2300, %v2299, 0
  %2304 = vmatprep.subr.mxu0 0.0
  %2305 = vmatpush1.msra.mxu0 0.0
  %2306 = vmatprep.subr.mxu0 0.0
  %2307 = vmatpush1.msra.mxu0 0.0
  %2308 = vmatprep.subr.mxu0 0.0
  %2309 = vmatpush1.msra.mxu0 0.0
  %2310 = vmatprep.subr.mxu0 0.0
  %2311 = vmatpush1.msra.mxu0 0.0
  %2312 = vmatprep.subr.mxu0 0.0
  %2313 = vmatpush1.msra.mxu0 0.0
  %2314 = vmatprep.subr.mxu0 0.0
  %2315 = vmatpush1.msra.mxu0 0.0
  %2316 = vmatprep.subr.mxu0 0.0
  %2317 = vmatpush1.msra.mxu0 0.0
  %2318 = vmatprep.subr.mxu0 0.0
  %2319 = vmatpush1.msra.mxu0 0.0
  %2320 = vmatprep.subr.mxu0 0.0
  %2321 = vmatpush1.msra.mxu0 0.0
  %2322 = vmatprep.subr.mxu0 0.0
  %2323 = vmatpush1.msra.mxu0 0.0
  %2324 = vmatprep.subr.mxu0 0.0
  %2325 = vmatpush1.msra.mxu0 0.0
  %2326 = vmatprep.subr.mxu0 0.0
  %2327 = vmatpush1.msra.mxu0 0.0
  %2328 = vmatprep.subr.mxu0 0.0
  %2329 = vmatpush1.msra.mxu0 %v2298
  %2330 = vmatprep.subr.mxu0 0.0
  %2331 = vmatpush1.msra.mxu0 %v2297
  %2332 = vmatprep.subr.mxu0 0.0
  %2333 = vmatpush1.msra.mxu0 %v2296
  %2334 = vmatprep.subr.mxu0 0.0
  %2335 = vmatpush1.msra.mxu0 %v2295
  %2336 = vmatprep.subr.mxu0 0.0
  %2337 = vmatpush2.msra.mxu0 0.0
  %2338 = vmatprep.subr.mxu0 0.0
  %2339 = vmatpush2.msra.mxu0 0.0
  %2340 = vmatprep.subr.mxu0 0.0
  %2341 = vmatpush2.msra.mxu0 0.0
  %2342 = vmatprep.subr.mxu0 0.0
  %2343 = vmatpush2.msra.mxu0 0.0
  %2344 = vmatprep.subr.mxu0 0.0
  %2345 = vmatpush2.msra.mxu0 0.0
  %2346 = vmatprep.subr.mxu0 0.0
  %2347 = vmatpush2.msra.mxu0 0.0
  %2348 = vmatprep.subr.mxu0 0.0
  %2349 = vmatpush2.msra.mxu0 0.0
  %2350 = vmatprep.subr.mxu0 0.0
  %2351 = vmatpush2.msra.mxu0 0.0
  %2352 = vmatprep.subr.mxu0 0.0
  %2353 = vmatpush2.msra.mxu0 0.0
  %2354 = vmatprep.subr.mxu0 0.0
  %2355 = vmatpush2.msra.mxu0 0.0
  %2356 = vmatprep.subr.mxu0 0.0
  %2357 = vmatpush2.msra.mxu0 0.0
  %2358 = vmatprep.subr.mxu0 0.0
  %2359 = vmatpush2.msra.mxu0 0.0
  %2360 = vmatprep.subr.mxu0 0.0
  %2361 = vmatpush2.msra.mxu0 0.0
  %2362 = vmatprep.subr.mxu0 0.0
  %2363 = vmatpush2.msra.mxu0 0.0
  %2364 = vmatprep.subr.mxu0 0.0
  %2365 = vmatpush2.msra.mxu0 0.0
  %2366 = vmatprep.subr.mxu0 0.0
  %2367 = vmatpush2.msra.mxu0 0.0
  %2368 = vmatprep.mubr.f32.mxu0 0.0
  %2369 = vmatmul.mubr.f32.gmra.mxu0 %v2302
  %v2370 = vpop.f32.mrf.mxu0
  %v2371 = vadd.f32 0.0, %v2370
  %v2372 = vpop.f32.mrf.mxu0
  %2373 = vdwg.mxu0
  %v2374 = vld [vmem:[%s9] sm:$0xff]
  %v2375 = vld [vmem:[%s9 + $0x8] sm:$0xff]
  %v2376 = vld [vmem:[%s9 + $0x10] sm:$0xff]
  %v2377 = vld [vmem:[%s9 + $0x18] sm:$0xff]
  %v2378 = vld [vmem:[%s9 + $0x20] sm:$0xff]
  %v2379 = vld [vmem:[%s9 + $0x28] sm:$0xff]
  %v2380 = vld [vmem:[%s9 + $0x30] sm:$0xff]
  %v2381 = vld [vmem:[%s9 + $0x38] sm:$0xff]
  %v2382 = vld [vmem:[%s9 + $0x40] sm:$0xff]
  %v2383 = vld [vmem:[%s9 + $0x48] sm:$0xff]
  %v2384 = vld [vmem:[%s9 + $0x50] sm:$0xff]
  %v2385 = vld [vmem:[%s9 + $0x58] sm:$0xff]
  %v2386 = vld [vmem:[%s9 + $0x60] sm:$0xff]
  %v2387 = vld [vmem:[%s9 + $0x68] sm:$0xff]
  %v2388 = vld [vmem:[%s9 + $0x70] sm:$0xff]
  %v2389 = vld [vmem:[%s9 + $0x78] sm:$0xff]
  %v2390 = vld [vmem:[%s10] sm:$0x1]
  %v2392 = vlaneseq
  %v2393 = vshrl.u32 %v2392, 7
  %v2394 = vsub.s32 0, %v2393
  %v2395 = vrot.slane %v2390, %v2394
  %2397 = vmatprep.subr.mxu0 0.0
  %2398 = vmatpush1.msra.mxu0 %v2389
  %2399 = vmatprep.subr.mxu0 0.0
  %2400 = vmatpush1.msra.mxu0 %v2388
  %2401 = vmatprep.subr.mxu0 0.0
  %2402 = vmatpush1.msra.mxu0 %v2387
  %2403 = vmatprep.subr.mxu0 0.0
  %2404 = vmatpush1.msra.mxu0 %v2386
  %2405 = vmatprep.subr.mxu0 0.0
  %2406 = vmatpush1.msra.mxu0 %v2385
  %2407 = vmatprep.subr.mxu0 0.0
  %2408 = vmatpush1.msra.mxu0 %v2384
  %2409 = vmatprep.subr.mxu0 0.0
  %2410 = vmatpush1.msra.mxu0 %v2383
  %2411 = vmatprep.subr.mxu0 0.0
  %2412 = vmatpush1.msra.mxu0 %v2382
  %2413 = vmatprep.subr.mxu0 0.0
  %2414 = vmatpush1.msra.mxu0 %v2381
  %2415 = vmatprep.subr.mxu0 0.0
  %2416 = vmatpush1.msra.mxu0 %v2380
  %2417 = vmatprep.subr.mxu0 0.0
  %2418 = vmatpush1.msra.mxu0 %v2379
  %2419 = vmatprep.subr.mxu0 0.0
  %2420 = vmatpush1.msra.mxu0 %v2378
  %2421 = vmatprep.subr.mxu0 0.0
  %2422 = vmatpush1.msra.mxu0 %v2377
  %2423 = vmatprep.subr.mxu0 0.0
  %2424 = vmatpush1.msra.mxu0 %v2376
  %2425 = vmatprep.subr.mxu0 0.0
  %2426 = vmatpush1.msra.mxu0 %v2375
  %2427 = vmatprep.subr.mxu0 0.0
  %2428 = vmatpush1.msra.mxu0 %v2374
  %2429 = vmatprep.subr.mxu0 0.0
  %2430 = vmatpush2.msra.mxu0 0.0
  %2431 = vmatprep.subr.mxu0 0.0
  %2432 = vmatpush2.msra.mxu0 0.0
  %2433 = vmatprep.subr.mxu0 0.0
  %2434 = vmatpush2.msra.mxu0 0.0
  %2435 = vmatprep.subr.mxu0 0.0
  %2436 = vmatpush2.msra.mxu0 0.0
  %2437 = vmatprep.subr.mxu0 0.0
  %2438 = vmatpush2.msra.mxu0 0.0
  %2439 = vmatprep.subr.mxu0 0.0
  %2440 = vmatpush2.msra.mxu0 0.0
  %2441 = vmatprep.subr.mxu0 0.0
  %2442 = vmatpush2.msra.mxu0 0.0
  %2443 = vmatprep.subr.mxu0 0.0
  %2444 = vmatpush2.msra.mxu0 0.0
  %2445 = vmatprep.subr.mxu0 0.0
  %2446 = vmatpush2.msra.mxu0 0.0
  %2447 = vmatprep.subr.mxu0 0.0
  %2448 = vmatpush2.msra.mxu0 0.0
  %2449 = vmatprep.subr.mxu0 0.0
  %2450 = vmatpush2.msra.mxu0 0.0
  %2451 = vmatprep.subr.mxu0 0.0
  %2452 = vmatpush2.msra.mxu0 0.0
  %2453 = vmatprep.subr.mxu0 0.0
  %2454 = vmatpush2.msra.mxu0 0.0
  %2455 = vmatprep.subr.mxu0 0.0
  %2456 = vmatpush2.msra.mxu0 0.0
  %2457 = vmatprep.subr.mxu0 0.0
  %2458 = vmatpush2.msra.mxu0 0.0
  %2459 = vmatprep.subr.mxu0 0.0
  %2460 = vmatpush2.msra.mxu0 0.0
  %2461 = vmatprep.mubr.f32.mxu0 0.0
  %2462 = vmatmul.mubr.f32.gmra.mxu0 %v2371
  %v2463 = vpop.f32.mrf.mxu0
  %v2464 = vadd.f32 %v2395, %v2463
  %v2465 = vpop.f32.mrf.mxu0
  %2466 = vdwg.mxu0
  %2467 = vst [vmem:[%s11] sm:$0x3] %v2464
  // Predicated region
  $region46: #{siamese_forward.1} parent=0 // pred_check
    _
  $region47: #{siamese_forward.1} parent=0 // pred_check_branch
    %2469 = sbr.rel (0) target = $region49
  $region48: #{siamese_forward.1} parent=0 // pred_region
    _
  $region49: #{siamese_forward.1} parent=0 // pred_fallthru
    _
  // Predicated region
  $region50: #{siamese_forward.1} parent=0 // pred_check
    _
  $region51: #{siamese_forward.1} parent=0 // pred_check_branch
    %2471 = sbr.rel (0) target = $region53
  $region52: #{siamese_forward.1} parent=0 // pred_region
    _
  $region53: #{siamese_forward.1} parent=0 // pred_fallthru
    _

</llo_original>
